<compile_context>
chip_gen: v7x
topology: tpu7x:2x2x1
jax: 0.10.0
libtpu: 0.0.40
codegen_flags: <defaults>
</compile_context>

<pallas_src>
import jax
import jax.numpy as jnp
from jax.experimental import pallas as pl
from jax.experimental.pallas import tpu as pltpu

# ----------------------- module hyper-parameters -----------------------------
NUM_ROBOT_STATES = 4
NUM_PRIVILEGE_ENC_OBS = 16
NUM_ACTOR_OBS = NUM_ROBOT_STATES + NUM_PRIVILEGE_ENC_OBS   # obs fed to privileged_actor
NUM_LATENT = 8
NUM_ACTIONS = 12
NUM_CRITIC_OBS = 48
ACTOR_HIDDEN = (256, 256, 256)
CRITIC_HIDDEN = (256, 256, 256)
ENC_HIDDEN = (128, 128)
INIT_NOISE_STD = 1.0
BATCH = 8
DEFAULT_BATCH_TILE = 128

# packed-input lane layout (one 128-lane f32 activation slab)
IN_LANES = 128
PRIV_OFF = 0                                      # lanes [0:16)  privileged obs
CURR_OFF = NUM_PRIVILEGE_ENC_OBS                  # lanes [16:20) current robot state
COBS_OFF = CURR_OFF + NUM_ROBOT_STATES            # lanes [20:68) critic obs
HEAD_LANES = 128                                  # lanes [0:12)=mean, lane 12=value
H = 256                                           # common (padded) hidden width
N_BIAS_ROWS = 9


def _elu(x):
    # ELU(alpha=1): x if x > 0 else exp(x)-1  (clamp exp arg so the unselected
    # branch never produces inf).
    return jnp.where(x > 0.0, x, jnp.exp(jnp.minimum(x, 0.0)) - 1.0)


# ------------------------------- fused kernel --------------------------------
def _fused_actor_critic_kernel(xin_ref, win_ref, wh_ref, whead_ref, bias_ref,
                               out_ref):
    xin = xin_ref[...].astype(jnp.bfloat16)                      # (TB, 128)

    def mm(x, w):
        # bf16 operands on the MXU, f32 accumulation
        return jnp.dot(x, w, preferred_element_type=jnp.float32)

    # ---- privilege encoder (real lanes [0:128), padded lanes stay zero)
    h = _elu(mm(xin, win_ref[0]) + bias_ref[0:1, :])
    h = _elu(mm(h.astype(jnp.bfloat16), wh_ref[0]) + bias_ref[1:2, :])

    # ---- actor MLP; layer 1 uses the folded (enc_out @ actor_in) composite
    #      plus the current-state term from the packed input
    xa = _elu(mm(h.astype(jnp.bfloat16), wh_ref[1]) + mm(xin, win_ref[1])
              + bias_ref[2:3, :])
    xa = _elu(mm(xa.astype(jnp.bfloat16), wh_ref[2]) + bias_ref[3:4, :])
    xa = _elu(mm(xa.astype(jnp.bfloat16), wh_ref[3]) + bias_ref[4:5, :])

    # ---- critic MLP
    xc = _elu(mm(xin, win_ref[2]) + bias_ref[5:6, :])
    xc = _elu(mm(xc.astype(jnp.bfloat16), wh_ref[4]) + bias_ref[6:7, :])
    xc = _elu(mm(xc.astype(jnp.bfloat16), wh_ref[5]) + bias_ref[7:8, :])

    # ---- packed lane-dense head: lanes [0:12)=action mean, lane 12=value
    out_ref[...] = (mm(xa.astype(jnp.bfloat16), whead_ref[0])
                    + mm(xc.astype(jnp.bfloat16), whead_ref[1])
                    + bias_ref[8:9, :HEAD_LANES])


# ------------------------------- wrappers -------------------------------------
_MM_WORK = 3 * IN_LANES * H + 6 * H * H + 2 * H * HEAD_LANES      # padded MACs/row


def _cost_estimate(batch_padded):
    flops = 2 * batch_padded * _MM_WORK
    trans = batch_padded * 8 * H                                   # 8 ELU layers
    w_bytes = 2 * _MM_WORK                                         # bf16 weights
    b_bytes = 4 * N_BIAS_ROWS * H
    io_bytes = 4 * batch_padded * (IN_LANES + HEAD_LANES)
    return pl.CostEstimate(flops=flops, transcendentals=trans,
                           bytes_accessed=w_bytes + b_bytes + io_bytes)


def actor_critic_forward(obs, critic_obs, kernel_params, *,
                         batch_tile=DEFAULT_BATCH_TILE):
    """Fused act_inference (privileged actor mean) + evaluate (value)."""
    win, wh, whead, bias = kernel_params
    batch = obs.shape[0]

    priv = obs[:, NUM_ROBOT_STATES:]          # privilege_mask  (privileged obs)
    curr = obs[:, :NUM_ROBOT_STATES]          # ~privilege_mask (current robot state)
    pad_lanes = IN_LANES - (NUM_PRIVILEGE_ENC_OBS + NUM_ROBOT_STATES
                            + NUM_CRITIC_OBS)
    xin = jnp.concatenate(
        [priv, curr, critic_obs,
         jnp.zeros((batch, pad_lanes), obs.dtype)], axis=-1)       # (B, 128)

    if batch <= batch_tile:
        tb, batch_padded = batch, batch                            # single block
    else:
        tb = batch_tile
        batch_padded = -(-batch // tb) * tb
    if batch_padded != batch:
        xin = jnp.pad(xin, ((0, batch_padded - batch), (0, 0)))

    out = pl.pallas_call(
        _fused_actor_critic_kernel,
        out_shape=jax.ShapeDtypeStruct((batch_padded, HEAD_LANES), jnp.float32),
        grid_spec=pltpu.PrefetchScalarGridSpec(
            num_scalar_prefetch=0,
            grid=(batch_padded // tb,),
            in_specs=[
                pl.BlockSpec((tb, IN_LANES), lambda i: (i, 0)),
                pl.BlockSpec((3, IN_LANES, H), lambda i: (0, 0, 0)),    # resident
                pl.BlockSpec((6, H, H), lambda i: (0, 0, 0)),           # resident
                pl.BlockSpec((2, H, HEAD_LANES), lambda i: (0, 0, 0)),  # resident
                pl.BlockSpec((N_BIAS_ROWS, H), lambda i: (0, 0)),       # resident
            ],
            out_specs=pl.BlockSpec((tb, HEAD_LANES), lambda i: (i, 0)),
        ),
        compiler_params=pltpu.CompilerParams(
            dimension_semantics=("parallel",)),                    # v7x megacore
        cost_estimate=_cost_estimate(batch_padded),
    )(xin, win, wh, whead, bias)

    mean = out[:batch, :NUM_ACTIONS]
    value = out[:batch, NUM_ACTIONS:NUM_ACTIONS + 1]
    return mean, value


actor_critic_forward_jit = jax.jit(actor_critic_forward,
                                   static_argnames=("batch_tile",))


# --------------------------- parameter construction ---------------------------
def _linear_params(key, fan_in, fan_out):
    # matches torch.nn.Linear default init: U(-1/sqrt(fan_in), 1/sqrt(fan_in))
    kw, kb = jax.random.split(key)
    bound = 1.0 / float(fan_in) ** 0.5
    w = jax.random.uniform(kw, (fan_in, fan_out), jnp.float32, -bound, bound)
    b = jax.random.uniform(kb, (fan_out,), jnp.float32, -bound, bound)
    return w, b


def build_params(key):
    keys = jax.random.split(key, 16)
    ki = iter(keys)
    enc_dims = (NUM_PRIVILEGE_ENC_OBS,) + ENC_HIDDEN + (NUM_LATENT,)
    enc_params = tuple(_linear_params(next(ki), enc_dims[i], enc_dims[i + 1])
                       for i in range(len(enc_dims) - 1))
    actor_dims = (NUM_ROBOT_STATES + NUM_LATENT,) + ACTOR_HIDDEN + (NUM_ACTIONS,)
    actor_params = tuple(_linear_params(next(ki), actor_dims[i], actor_dims[i + 1])
                         for i in range(len(actor_dims) - 1))
    critic_dims = (NUM_CRITIC_OBS,) + CRITIC_HIDDEN + (1,)
    critic_params = tuple(_linear_params(next(ki), critic_dims[i], critic_dims[i + 1])
                          for i in range(len(critic_dims) - 1))
    std = INIT_NOISE_STD * jnp.ones((NUM_ACTIONS,), jnp.float32)  # self.std parameter
    return enc_params, actor_params, critic_params, std


def prepare_kernel_params(enc_params, actor_params, critic_params):
    """One-time packing into 4 kernel slabs (cuts ~25 prologue DMAs to 5)."""
    def unpack(p):
        w, b = p
        return jnp.asarray(w, jnp.float32), jnp.asarray(b, jnp.float32).reshape(-1)

    (we1, be1), (we2, be2), (we3, be3) = (unpack(p) for p in enc_params)
    (wa1, ba1), (wa2, ba2), (wa3, ba3), (wa4, ba4) = (unpack(p) for p in actor_params)
    (wc1, bc1), (wc2, bc2), (wc3, bc3), (wc4, bc4) = (unpack(p) for p in critic_params)

    wa1l, wa1c = wa1[:NUM_LATENT], wa1[NUM_LATENT:]   # latent rows / curr-state rows

    # fold the rank-8 latent bottleneck (encoder output has no activation):
    #   latent @ wa1l + ba1  ==  h2 @ (we3 @ wa1l) + (ba1 + be3 @ wa1l)
    w_fold = we3 @ wa1l                               # (128, 256), built in f32
    ba1_fold = ba1 + be3 @ wa1l                       # (256,)

    # ---- first-layer slab: acts on packed input [priv | curr | cobs | 0]
    win = jnp.zeros((3, IN_LANES, H), jnp.float32)
    win = win.at[0, PRIV_OFF:PRIV_OFF + NUM_PRIVILEGE_ENC_OBS, :ENC_HIDDEN[0]].set(we1)
    win = win.at[1, CURR_OFF:CURR_OFF + NUM_ROBOT_STATES, :].set(wa1c)
    win = win.at[2, COBS_OFF:COBS_OFF + NUM_CRITIC_OBS, :].set(wc1)

    # ---- hidden slab (K/N zero-padded to 256 where needed)
    wh = jnp.zeros((6, H, H), jnp.float32)
    wh = wh.at[0, :ENC_HIDDEN[0], :ENC_HIDDEN[1]].set(we2)
    wh = wh.at[1, :ENC_HIDDEN[1], :].set(w_fold)
    wh = wh.at[2].set(wa2)
    wh = wh.at[3].set(wa3)
    wh = wh.at[4].set(wc2)
    wh = wh.at[5].set(wc3)

    # ---- lane-dense combined head: lanes [0:12)=mean, lane 12=value
    whead = jnp.zeros((2, H, HEAD_LANES), jnp.float32)
    whead = whead.at[0, :, :NUM_ACTIONS].set(wa4)
    whead = whead.at[1, :, NUM_ACTIONS:NUM_ACTIONS + 1].set(wc4)

    # ---- bias slab (f32), one row per layer
    bias = jnp.zeros((N_BIAS_ROWS, H), jnp.float32)
    bias = bias.at[0, :ENC_HIDDEN[0]].set(be1)
    bias = bias.at[1, :ENC_HIDDEN[1]].set(be2)
    bias = bias.at[2, :].set(ba1_fold)
    bias = bias.at[3, :].set(ba2)
    bias = bias.at[4, :].set(ba3)
    bias = bias.at[5, :].set(bc1)
    bias = bias.at[6, :].set(bc2)
    bias = bias.at[7, :].set(bc3)
    bias = bias.at[8, :NUM_ACTIONS].set(ba4)
    bias = bias.at[8, NUM_ACTIONS:NUM_ACTIONS + 1].set(bc4)

    return (win.astype(jnp.bfloat16), wh.astype(jnp.bfloat16),
            whead.astype(jnp.bfloat16), bias)


# ------------------------------ pure-JAX references ----------------------------
def _mlp_f32(x, params):
    n = len(params)
    for i, (w, b) in enumerate(params):
        x = x @ w + b
        if i != n - 1:
            x = _elu(x)
    return x


def forward_f32_ref(obs, cobs, enc_p, actor_p, critic_p):
    curr = obs[:, :NUM_ROBOT_STATES]
    priv = obs[:, NUM_ROBOT_STATES:]
    latent = _mlp_f32(priv, enc_p)
    mean = _mlp_f32(jnp.concatenate([latent, curr], axis=-1), actor_p)
    value = _mlp_f32(cobs, critic_p)
    return mean, value


def forward_kernel_mimic_ref(obs, cobs, kernel_params):
    """Exact dtype/algorithm mimic of the fused kernel in plain jnp."""
    win, wh, whead, bias = kernel_params
    batch = obs.shape[0]
    priv = obs[:, NUM_ROBOT_STATES:]
    curr = obs[:, :NUM_ROBOT_STATES]
    pad = IN_LANES - (NUM_PRIVILEGE_ENC_OBS + NUM_ROBOT_STATES + NUM_CRITIC_OBS)
    xin = jnp.concatenate([priv, curr, cobs, jnp.zeros((batch, pad), obs.dtype)],
                          axis=-1)

    def mm(x, w):
        return jnp.dot(x.astype(jnp.bfloat16), w, preferred_element_type=jnp.float32)

    h = _elu(mm(xin, win[0]) + bias[0:1])
    h = _elu(mm(h, wh[0]) + bias[1:2])
    xa = _elu(mm(h, wh[1]) + mm(xin, win[1]) + bias[2:3])
    xa = _elu(mm(xa, wh[2]) + bias[3:4])
    xa = _elu(mm(xa, wh[3]) + bias[4:5])
    xc = _elu(mm(xin, win[2]) + bias[5:6])
    xc = _elu(mm(xc, wh[4]) + bias[6:7])
    xc = _elu(mm(xc, wh[5]) + bias[7:8])
    out = mm(xa, whead[0]) + mm(xc, whead[1]) + bias[8:9, :HEAD_LANES]
    return out[:, :NUM_ACTIONS], out[:, NUM_ACTIONS:NUM_ACTIONS + 1]


# ---------------------------------- main --------------------------------------
if __name__ == "__main__":
    key = jax.random.PRNGKey(0)
    k_params, k_obs, k_cobs, k_obs2, k_cobs2 = jax.random.split(key, 5)
    enc_params, actor_params, critic_params, std = build_params(k_params)
    kernel_params = prepare_kernel_params(enc_params, actor_params, critic_params)

    obs = jax.random.normal(k_obs, (BATCH, NUM_ACTOR_OBS), jnp.float32)
    critic_obs = jax.random.normal(k_cobs, (BATCH, NUM_CRITIC_OBS), jnp.float32)

    # fused act_inference (privileged actor mean) + evaluate (value), single block
    mean, value = actor_critic_forward_jit(obs, critic_obs, kernel_params)
    mean = jax.block_until_ready(mean)
    value = jax.block_until_ready(value)
    assert mean.shape == (BATCH, NUM_ACTIONS) and value.shape == (BATCH, 1)

    # correctness vs exact kernel-mimic reference (tight tol) ...
    mean_k, value_k = forward_kernel_mimic_ref(obs, critic_obs, kernel_params)
    assert jnp.allclose(mean, mean_k, atol=1e-3, rtol=1e-3)
    assert jnp.allclose(value, value_k, atol=1e-3, rtol=1e-3)

    # ... and vs full-precision module semantics (loose tol for bf16 weights/fold)
    mean_f, value_f = forward_f32_ref(obs, critic_obs,
                                      enc_params, actor_params, critic_params)
    assert jnp.allclose(mean, mean_f, atol=5e-2, rtol=5e-2)
    assert jnp.allclose(value, value_f, atol=5e-2, rtol=5e-2)

    # gridded (megacore) path: batch larger than the tile -> grid over batch
    B2, TB2 = 64, 32
    obs2 = jax.random.normal(k_obs2, (B2, NUM_ACTOR_OBS), jnp.float32)
    cobs2 = jax.random.normal(k_cobs2, (B2, NUM_CRITIC_OBS), jnp.float32)
    mean2, value2 = actor_critic_forward_jit(obs2, cobs2, kernel_params,
                                             batch_tile=TB2)
    mean2 = jax.block_until_ready(mean2)
    value2 = jax.block_until_ready(value2)
    mean2_f, value2_f = forward_f32_ref(obs2, cobs2,
                                        enc_params, actor_params, critic_params)
    assert mean2.shape == (B2, NUM_ACTIONS) and value2.shape == (B2, 1)
    assert jnp.allclose(mean2, mean2_f, atol=5e-2, rtol=5e-2)
    assert jnp.allclose(value2, value2_f, atol=5e-2, rtol=5e-2)

    # distribution stddev would be broadcast of self.std (mean * 0 + std)
    _ = jnp.broadcast_to(std, mean.shape)

    print("KERNEL_OK")
</pallas_src>

<mosaic_0001>
module attributes {stable_mosaic.version = 11 : i64} {
  func.func @_fused_actor_critic_kernel(%arg0: i32, %arg1: memref<8x128xf32, #tpu.memory_space<vmem>>, %arg2: memref<3x128x256xbf16, #tpu.memory_space<vmem>>, %arg3: memref<6x256x256xbf16, #tpu.memory_space<vmem>>, %arg4: memref<2x256x128xbf16, #tpu.memory_space<vmem>>, %arg5: memref<9x256xf32, #tpu.memory_space<vmem>>, %arg6: memref<8x128xf32, #tpu.memory_space<vmem>>) attributes {dimension_semantics = [#tpu.dimension_semantics<parallel>], iteration_bounds = array<i64: 1>, scalar_prefetch = 0 : i64, scratch_operands = 0 : i64, tpu.core_type = #tpu.core_type<tc>, window_params = [{transform_indices = @transform_0, window_bounds = array<i64: 8, 128>}, {pipeline_mode = #tpu.pipeline_mode<synchronous>, transform_indices = @transform_1, window_bounds = array<i64: 3, 128, 256>}, {pipeline_mode = #tpu.pipeline_mode<synchronous>, transform_indices = @transform_2, window_bounds = array<i64: 6, 256, 256>}, {pipeline_mode = #tpu.pipeline_mode<synchronous>, transform_indices = @transform_3, window_bounds = array<i64: 2, 256, 128>}, {pipeline_mode = #tpu.pipeline_mode<synchronous>, transform_indices = @transform_4, window_bounds = array<i64: 9, 256>}, {transform_indices = @transform_5, window_bounds = array<i64: 8, 128>}]} {
    %c0 = arith.constant 0 : index
    %c0_0 = arith.constant 0 : index
    %0 = vector.load %arg1[%c0, %c0_0] : memref<8x128xf32, #tpu.memory_space<vmem>>, vector<8x128xf32>
    %1 = arith.truncf %0 : vector<8x128xf32> to vector<8x128xbf16>
    %c0_1 = arith.constant 0 : index
    %c0_2 = arith.constant 0 : index
    %c0_3 = arith.constant 0 : index
    %2 = vector.load %arg2[%c0_1, %c0_2, %c0_3] : memref<3x128x256xbf16, #tpu.memory_space<vmem>>, vector<1x128x256xbf16>
    %3 = vector.shape_cast %2 : vector<1x128x256xbf16> to vector<128x256xbf16>
    %cst = arith.constant dense<0.000000e+00> : vector<8x256xf32>
    %4 = tpu.matmul %1, %3, %cst {dimension_numbers = #tpu.dot_dimension_numbers<[1], [0], [0], [1], [0, 0, 1, 1], [], []>} : vector<8x128xbf16>, vector<128x256xbf16>, vector<8x256xf32> -> vector<8x256xf32>
    %c0_4 = arith.constant 0 : index
    %c0_5 = arith.constant 0 : index
    %5 = vector.load %arg5[%c0_4, %c0_5] : memref<9x256xf32, #tpu.memory_space<vmem>>, vector<1x256xf32>
    %6 = vector.broadcast %5 : vector<1x256xf32> to vector<8x256xf32>
    %7 = arith.addf %4, %6 : vector<8x256xf32>
    %cst_6 = arith.constant 0.000000e+00 : f32
    %8 = vector.broadcast %cst_6 : f32 to vector<8x256xf32>
    %9 = arith.cmpf ogt, %7, %8 : vector<8x256xf32>
    %cst_7 = arith.constant 0.000000e+00 : f32
    %10 = vector.broadcast %cst_7 : f32 to vector<8x256xf32>
    %11 = arith.minimumf %7, %10 : vector<8x256xf32>
    %12 = math.exp %11 : vector<8x256xf32>
    %cst_8 = arith.constant 1.000000e+00 : f32
    %13 = vector.broadcast %cst_8 : f32 to vector<8x256xf32>
    %14 = arith.subf %12, %13 : vector<8x256xf32>
    %15 = arith.select %9, %7, %14 : vector<8x256xi1>, vector<8x256xf32>
    %16 = arith.truncf %15 : vector<8x256xf32> to vector<8x256xbf16>
    %c0_9 = arith.constant 0 : index
    %c0_10 = arith.constant 0 : index
    %c0_11 = arith.constant 0 : index
    %17 = vector.load %arg3[%c0_9, %c0_10, %c0_11] : memref<6x256x256xbf16, #tpu.memory_space<vmem>>, vector<1x256x256xbf16>
    %18 = vector.shape_cast %17 : vector<1x256x256xbf16> to vector<256x256xbf16>
    %cst_12 = arith.constant dense<0.000000e+00> : vector<8x256xf32>
    %19 = tpu.matmul %16, %18, %cst_12 {dimension_numbers = #tpu.dot_dimension_numbers<[1], [0], [0], [1], [0, 0, 1, 1], [], []>} : vector<8x256xbf16>, vector<256x256xbf16>, vector<8x256xf32> -> vector<8x256xf32>
    %c1 = arith.constant 1 : index
    %c0_13 = arith.constant 0 : index
    %20 = vector.load %arg5[%c1, %c0_13] : memref<9x256xf32, #tpu.memory_space<vmem>>, vector<1x256xf32>
    %21 = vector.broadcast %20 : vector<1x256xf32> to vector<8x256xf32>
    %22 = arith.addf %19, %21 : vector<8x256xf32>
    %cst_14 = arith.constant 0.000000e+00 : f32
    %23 = vector.broadcast %cst_14 : f32 to vector<8x256xf32>
    %24 = arith.cmpf ogt, %22, %23 : vector<8x256xf32>
    %cst_15 = arith.constant 0.000000e+00 : f32
    %25 = vector.broadcast %cst_15 : f32 to vector<8x256xf32>
    %26 = arith.minimumf %22, %25 : vector<8x256xf32>
    %27 = math.exp %26 : vector<8x256xf32>
    %cst_16 = arith.constant 1.000000e+00 : f32
    %28 = vector.broadcast %cst_16 : f32 to vector<8x256xf32>
    %29 = arith.subf %27, %28 : vector<8x256xf32>
    %30 = arith.select %24, %22, %29 : vector<8x256xi1>, vector<8x256xf32>
    %31 = arith.truncf %30 : vector<8x256xf32> to vector<8x256xbf16>
    %c1_17 = arith.constant 1 : index
    %c0_18 = arith.constant 0 : index
    %c0_19 = arith.constant 0 : index
    %32 = vector.load %arg3[%c1_17, %c0_18, %c0_19] : memref<6x256x256xbf16, #tpu.memory_space<vmem>>, vector<1x256x256xbf16>
    %33 = vector.shape_cast %32 : vector<1x256x256xbf16> to vector<256x256xbf16>
    %cst_20 = arith.constant dense<0.000000e+00> : vector<8x256xf32>
    %34 = tpu.matmul %31, %33, %cst_20 {dimension_numbers = #tpu.dot_dimension_numbers<[1], [0], [0], [1], [0, 0, 1, 1], [], []>} : vector<8x256xbf16>, vector<256x256xbf16>, vector<8x256xf32> -> vector<8x256xf32>
    %c1_21 = arith.constant 1 : index
    %c0_22 = arith.constant 0 : index
    %c0_23 = arith.constant 0 : index
    %35 = vector.load %arg2[%c1_21, %c0_22, %c0_23] : memref<3x128x256xbf16, #tpu.memory_space<vmem>>, vector<1x128x256xbf16>
    %36 = vector.shape_cast %35 : vector<1x128x256xbf16> to vector<128x256xbf16>
    %cst_24 = arith.constant dense<0.000000e+00> : vector<8x256xf32>
    %37 = tpu.matmul %1, %36, %cst_24 {dimension_numbers = #tpu.dot_dimension_numbers<[1], [0], [0], [1], [0, 0, 1, 1], [], []>} : vector<8x128xbf16>, vector<128x256xbf16>, vector<8x256xf32> -> vector<8x256xf32>
    %38 = arith.addf %34, %37 : vector<8x256xf32>
    %c2 = arith.constant 2 : index
    %c0_25 = arith.constant 0 : index
    %39 = vector.load %arg5[%c2, %c0_25] : memref<9x256xf32, #tpu.memory_space<vmem>>, vector<1x256xf32>
    %40 = vector.broadcast %39 : vector<1x256xf32> to vector<8x256xf32>
    %41 = arith.addf %38, %40 : vector<8x256xf32>
    %cst_26 = arith.constant 0.000000e+00 : f32
    %42 = vector.broadcast %cst_26 : f32 to vector<8x256xf32>
    %43 = arith.cmpf ogt, %41, %42 : vector<8x256xf32>
    %cst_27 = arith.constant 0.000000e+00 : f32
    %44 = vector.broadcast %cst_27 : f32 to vector<8x256xf32>
    %45 = arith.minimumf %41, %44 : vector<8x256xf32>
    %46 = math.exp %45 : vector<8x256xf32>
    %cst_28 = arith.constant 1.000000e+00 : f32
    %47 = vector.broadcast %cst_28 : f32 to vector<8x256xf32>
    %48 = arith.subf %46, %47 : vector<8x256xf32>
    %49 = arith.select %43, %41, %48 : vector<8x256xi1>, vector<8x256xf32>
    %50 = arith.truncf %49 : vector<8x256xf32> to vector<8x256xbf16>
    %c2_29 = arith.constant 2 : index
    %c0_30 = arith.constant 0 : index
    %c0_31 = arith.constant 0 : index
    %51 = vector.load %arg3[%c2_29, %c0_30, %c0_31] : memref<6x256x256xbf16, #tpu.memory_space<vmem>>, vector<1x256x256xbf16>
    %52 = vector.shape_cast %51 : vector<1x256x256xbf16> to vector<256x256xbf16>
    %cst_32 = arith.constant dense<0.000000e+00> : vector<8x256xf32>
    %53 = tpu.matmul %50, %52, %cst_32 {dimension_numbers = #tpu.dot_dimension_numbers<[1], [0], [0], [1], [0, 0, 1, 1], [], []>} : vector<8x256xbf16>, vector<256x256xbf16>, vector<8x256xf32> -> vector<8x256xf32>
    %c3 = arith.constant 3 : index
    %c0_33 = arith.constant 0 : index
    %54 = vector.load %arg5[%c3, %c0_33] : memref<9x256xf32, #tpu.memory_space<vmem>>, vector<1x256xf32>
    %55 = vector.broadcast %54 : vector<1x256xf32> to vector<8x256xf32>
    %56 = arith.addf %53, %55 : vector<8x256xf32>
    %cst_34 = arith.constant 0.000000e+00 : f32
    %57 = vector.broadcast %cst_34 : f32 to vector<8x256xf32>
    %58 = arith.cmpf ogt, %56, %57 : vector<8x256xf32>
    %cst_35 = arith.constant 0.000000e+00 : f32
    %59 = vector.broadcast %cst_35 : f32 to vector<8x256xf32>
    %60 = arith.minimumf %56, %59 : vector<8x256xf32>
    %61 = math.exp %60 : vector<8x256xf32>
    %cst_36 = arith.constant 1.000000e+00 : f32
    %62 = vector.broadcast %cst_36 : f32 to vector<8x256xf32>
    %63 = arith.subf %61, %62 : vector<8x256xf32>
    %64 = arith.select %58, %56, %63 : vector<8x256xi1>, vector<8x256xf32>
    %65 = arith.truncf %64 : vector<8x256xf32> to vector<8x256xbf16>
    %c3_37 = arith.constant 3 : index
    %c0_38 = arith.constant 0 : index
    %c0_39 = arith.constant 0 : index
    %66 = vector.load %arg3[%c3_37, %c0_38, %c0_39] : memref<6x256x256xbf16, #tpu.memory_space<vmem>>, vector<1x256x256xbf16>
    %67 = vector.shape_cast %66 : vector<1x256x256xbf16> to vector<256x256xbf16>
    %cst_40 = arith.constant dense<0.000000e+00> : vector<8x256xf32>
    %68 = tpu.matmul %65, %67, %cst_40 {dimension_numbers = #tpu.dot_dimension_numbers<[1], [0], [0], [1], [0, 0, 1, 1], [], []>} : vector<8x256xbf16>, vector<256x256xbf16>, vector<8x256xf32> -> vector<8x256xf32>
    %c4 = arith.constant 4 : index
    %c0_41 = arith.constant 0 : index
    %69 = vector.load %arg5[%c4, %c0_41] : memref<9x256xf32, #tpu.memory_space<vmem>>, vector<1x256xf32>
    %70 = vector.broadcast %69 : vector<1x256xf32> to vector<8x256xf32>
    %71 = arith.addf %68, %70 : vector<8x256xf32>
    %cst_42 = arith.constant 0.000000e+00 : f32
    %72 = vector.broadcast %cst_42 : f32 to vector<8x256xf32>
    %73 = arith.cmpf ogt, %71, %72 : vector<8x256xf32>
    %cst_43 = arith.constant 0.000000e+00 : f32
    %74 = vector.broadcast %cst_43 : f32 to vector<8x256xf32>
    %75 = arith.minimumf %71, %74 : vector<8x256xf32>
    %76 = math.exp %75 : vector<8x256xf32>
    %cst_44 = arith.constant 1.000000e+00 : f32
    %77 = vector.broadcast %cst_44 : f32 to vector<8x256xf32>
    %78 = arith.subf %76, %77 : vector<8x256xf32>
    %79 = arith.select %73, %71, %78 : vector<8x256xi1>, vector<8x256xf32>
    %c2_45 = arith.constant 2 : index
    %c0_46 = arith.constant 0 : index
    %c0_47 = arith.constant 0 : index
    %80 = vector.load %arg2[%c2_45, %c0_46, %c0_47] : memref<3x128x256xbf16, #tpu.memory_space<vmem>>, vector<1x128x256xbf16>
    %81 = vector.shape_cast %80 : vector<1x128x256xbf16> to vector<128x256xbf16>
    %cst_48 = arith.constant dense<0.000000e+00> : vector<8x256xf32>
    %82 = tpu.matmul %1, %81, %cst_48 {dimension_numbers = #tpu.dot_dimension_numbers<[1], [0], [0], [1], [0, 0, 1, 1], [], []>} : vector<8x128xbf16>, vector<128x256xbf16>, vector<8x256xf32> -> vector<8x256xf32>
    %c5 = arith.constant 5 : index
    %c0_49 = arith.constant 0 : index
    %83 = vector.load %arg5[%c5, %c0_49] : memref<9x256xf32, #tpu.memory_space<vmem>>, vector<1x256xf32>
    %84 = vector.broadcast %83 : vector<1x256xf32> to vector<8x256xf32>
    %85 = arith.addf %82, %84 : vector<8x256xf32>
    %cst_50 = arith.constant 0.000000e+00 : f32
    %86 = vector.broadcast %cst_50 : f32 to vector<8x256xf32>
    %87 = arith.cmpf ogt, %85, %86 : vector<8x256xf32>
    %cst_51 = arith.constant 0.000000e+00 : f32
    %88 = vector.broadcast %cst_51 : f32 to vector<8x256xf32>
    %89 = arith.minimumf %85, %88 : vector<8x256xf32>
    %90 = math.exp %89 : vector<8x256xf32>
    %cst_52 = arith.constant 1.000000e+00 : f32
    %91 = vector.broadcast %cst_52 : f32 to vector<8x256xf32>
    %92 = arith.subf %90, %91 : vector<8x256xf32>
    %93 = arith.select %87, %85, %92 : vector<8x256xi1>, vector<8x256xf32>
    %94 = arith.truncf %93 : vector<8x256xf32> to vector<8x256xbf16>
    %c4_53 = arith.constant 4 : index
    %c0_54 = arith.constant 0 : index
    %c0_55 = arith.constant 0 : index
    %95 = vector.load %arg3[%c4_53, %c0_54, %c0_55] : memref<6x256x256xbf16, #tpu.memory_space<vmem>>, vector<1x256x256xbf16>
    %96 = vector.shape_cast %95 : vector<1x256x256xbf16> to vector<256x256xbf16>
    %cst_56 = arith.constant dense<0.000000e+00> : vector<8x256xf32>
    %97 = tpu.matmul %94, %96, %cst_56 {dimension_numbers = #tpu.dot_dimension_numbers<[1], [0], [0], [1], [0, 0, 1, 1], [], []>} : vector<8x256xbf16>, vector<256x256xbf16>, vector<8x256xf32> -> vector<8x256xf32>
    %c6 = arith.constant 6 : index
    %c0_57 = arith.constant 0 : index
    %98 = vector.load %arg5[%c6, %c0_57] : memref<9x256xf32, #tpu.memory_space<vmem>>, vector<1x256xf32>
    %99 = vector.broadcast %98 : vector<1x256xf32> to vector<8x256xf32>
    %100 = arith.addf %97, %99 : vector<8x256xf32>
    %cst_58 = arith.constant 0.000000e+00 : f32
    %101 = vector.broadcast %cst_58 : f32 to vector<8x256xf32>
    %102 = arith.cmpf ogt, %100, %101 : vector<8x256xf32>
    %cst_59 = arith.constant 0.000000e+00 : f32
    %103 = vector.broadcast %cst_59 : f32 to vector<8x256xf32>
    %104 = arith.minimumf %100, %103 : vector<8x256xf32>
    %105 = math.exp %104 : vector<8x256xf32>
    %cst_60 = arith.constant 1.000000e+00 : f32
    %106 = vector.broadcast %cst_60 : f32 to vector<8x256xf32>
    %107 = arith.subf %105, %106 : vector<8x256xf32>
    %108 = arith.select %102, %100, %107 : vector<8x256xi1>, vector<8x256xf32>
    %109 = arith.truncf %108 : vector<8x256xf32> to vector<8x256xbf16>
    %c5_61 = arith.constant 5 : index
    %c0_62 = arith.constant 0 : index
    %c0_63 = arith.constant 0 : index
    %110 = vector.load %arg3[%c5_61, %c0_62, %c0_63] : memref<6x256x256xbf16, #tpu.memory_space<vmem>>, vector<1x256x256xbf16>
    %111 = vector.shape_cast %110 : vector<1x256x256xbf16> to vector<256x256xbf16>
    %cst_64 = arith.constant dense<0.000000e+00> : vector<8x256xf32>
    %112 = tpu.matmul %109, %111, %cst_64 {dimension_numbers = #tpu.dot_dimension_numbers<[1], [0], [0], [1], [0, 0, 1, 1], [], []>} : vector<8x256xbf16>, vector<256x256xbf16>, vector<8x256xf32> -> vector<8x256xf32>
    %c7 = arith.constant 7 : index
    %c0_65 = arith.constant 0 : index
    %113 = vector.load %arg5[%c7, %c0_65] : memref<9x256xf32, #tpu.memory_space<vmem>>, vector<1x256xf32>
    %114 = vector.broadcast %113 : vector<1x256xf32> to vector<8x256xf32>
    %115 = arith.addf %112, %114 : vector<8x256xf32>
    %cst_66 = arith.constant 0.000000e+00 : f32
    %116 = vector.broadcast %cst_66 : f32 to vector<8x256xf32>
    %117 = arith.cmpf ogt, %115, %116 : vector<8x256xf32>
    %cst_67 = arith.constant 0.000000e+00 : f32
    %118 = vector.broadcast %cst_67 : f32 to vector<8x256xf32>
    %119 = arith.minimumf %115, %118 : vector<8x256xf32>
    %120 = math.exp %119 : vector<8x256xf32>
    %cst_68 = arith.constant 1.000000e+00 : f32
    %121 = vector.broadcast %cst_68 : f32 to vector<8x256xf32>
    %122 = arith.subf %120, %121 : vector<8x256xf32>
    %123 = arith.select %117, %115, %122 : vector<8x256xi1>, vector<8x256xf32>
    %124 = arith.truncf %79 : vector<8x256xf32> to vector<8x256xbf16>
    %c0_69 = arith.constant 0 : index
    %c0_70 = arith.constant 0 : index
    %c0_71 = arith.constant 0 : index
    %125 = vector.load %arg4[%c0_69, %c0_70, %c0_71] : memref<2x256x128xbf16, #tpu.memory_space<vmem>>, vector<1x256x128xbf16>
    %126 = vector.shape_cast %125 : vector<1x256x128xbf16> to vector<256x128xbf16>
    %cst_72 = arith.constant dense<0.000000e+00> : vector<8x128xf32>
    %127 = tpu.matmul %124, %126, %cst_72 {dimension_numbers = #tpu.dot_dimension_numbers<[1], [0], [0], [1], [0, 0, 1, 1], [], []>} : vector<8x256xbf16>, vector<256x128xbf16>, vector<8x128xf32> -> vector<8x128xf32>
    %128 = arith.truncf %123 : vector<8x256xf32> to vector<8x256xbf16>
    %c1_73 = arith.constant 1 : index
    %c0_74 = arith.constant 0 : index
    %c0_75 = arith.constant 0 : index
    %129 = vector.load %arg4[%c1_73, %c0_74, %c0_75] : memref<2x256x128xbf16, #tpu.memory_space<vmem>>, vector<1x256x128xbf16>
    %130 = vector.shape_cast %129 : vector<1x256x128xbf16> to vector<256x128xbf16>
    %cst_76 = arith.constant dense<0.000000e+00> : vector<8x128xf32>
    %131 = tpu.matmul %128, %130, %cst_76 {dimension_numbers = #tpu.dot_dimension_numbers<[1], [0], [0], [1], [0, 0, 1, 1], [], []>} : vector<8x256xbf16>, vector<256x128xbf16>, vector<8x128xf32> -> vector<8x128xf32>
    %132 = arith.addf %127, %131 : vector<8x128xf32>
    %c8 = arith.constant 8 : index
    %c0_77 = arith.constant 0 : index
    %133 = vector.load %arg5[%c8, %c0_77] : memref<9x256xf32, #tpu.memory_space<vmem>>, vector<1x128xf32>
    %134 = vector.broadcast %133 : vector<1x128xf32> to vector<8x128xf32>
    %135 = arith.addf %132, %134 : vector<8x128xf32>
    %c0_78 = arith.constant 0 : index
    %c0_79 = arith.constant 0 : index
    %136 = vector.load %arg6[%c0_78, %c0_79] : memref<8x128xf32, #tpu.memory_space<vmem>>, vector<8x128xf32>
    tpu.vector_store %arg6[%c0_78, %c0_79], %135 {strides = array<i32>} : memref<8x128xf32, #tpu.memory_space<vmem>>, vector<8x128xf32>,
    return
  }
  func.func @transform_0(%arg0: i32) -> (i32, i32) {
    %c0_i32 = arith.constant 0 : i32
    %c0_i32_0 = arith.constant 0 : i32
    return %arg0, %c0_i32 : i32, i32
  }
  func.func @transform_1(%arg0: i32) -> (i32, i32, i32) {
    %c0_i32 = arith.constant 0 : i32
    %c0_i32_0 = arith.constant 0 : i32
    %c0_i32_1 = arith.constant 0 : i32
    %c0_i32_2 = arith.constant 0 : i32
    return %c0_i32, %c0_i32_0, %c0_i32_1 : i32, i32, i32
  }
  func.func @transform_2(%arg0: i32) -> (i32, i32, i32) {
    %c0_i32 = arith.constant 0 : i32
    %c0_i32_0 = arith.constant 0 : i32
    %c0_i32_1 = arith.constant 0 : i32
    %c0_i32_2 = arith.constant 0 : i32
    return %c0_i32, %c0_i32_0, %c0_i32_1 : i32, i32, i32
  }
  func.func @transform_3(%arg0: i32) -> (i32, i32, i32) {
    %c0_i32 = arith.constant 0 : i32
    %c0_i32_0 = arith.constant 0 : i32
    %c0_i32_1 = arith.constant 0 : i32
    %c0_i32_2 = arith.constant 0 : i32
    return %c0_i32, %c0_i32_0, %c0_i32_1 : i32, i32, i32
  }
  func.func @transform_4(%arg0: i32) -> (i32, i32) {
    %c0_i32 = arith.constant 0 : i32
    %c0_i32_0 = arith.constant 0 : i32
    %c0_i32_1 = arith.constant 0 : i32
    return %c0_i32, %c0_i32_0 : i32, i32
  }
  func.func @transform_5(%arg0: i32) -> (i32, i32) {
    %c0_i32 = arith.constant 0 : i32
    %c0_i32_0 = arith.constant 0 : i32
    return %arg0, %c0_i32 : i32, i32
  }
}

</mosaic_0001>

<llo_original>
// kernel: actor_critic_forward.1
$region0: #{actor_critic_forward.1}
  #allocation0 [shape = 'u32[]', space=smem, size = 0x4, offset = 0x4, fixed_abs, tag = 'smem constant byte address 0x4 - core index']
  #allocation1 [shape = 'u32[144,128]{1,0:T(1,128)}', space=vmem, size = 0x12000, scoped, tag = 'internal scratch']
  %s0 = inlined_call_operand.vmem [shape: f32[8,128], index: 0, kind: input, shape index: {}]
  %s1 = inlined_call_operand.hbm [shape: bf16[3,128,256], index: 1, kind: input, shape index: {}]
  %s2 = inlined_call_operand.hbm [shape: bf16[6,256,256], index: 2, kind: input, shape index: {}]
  %s3 = inlined_call_operand.hbm [shape: bf16[2,256,128], index: 3, kind: input, shape index: {}]
  %s4 = inlined_call_operand.vmem [shape: f32[9,256], index: 4, kind: input, shape index: {}]
  %s5 = inlined_call_operand.vmem [shape: f32[8,128], index: 5, kind: output, shape index: {}]
  %s6 = sld [smem:[#allocation0]]
  $region42: #{actor_critic_forward.1} parent=0
    _
  %s8 = ssub.s32 1, %s6
  %s9 = scalar_select 0, %s8, %s6
  $region1: #{actor_critic_forward.1} parent=0
    #allocation2 [shape = 'u8[196608]{0}', space=vmem, size = 0x30000, scoped, tag = 'input window, operand 1, single buffered']
    #allocation3 [shape = 's32[1]{0}', space=sflag, size = 0x4, scoped, tag = 'scoped memory for actor_critic_forward.1']
    #allocation4 [shape = 'u8[786432]{0}', space=vmem, size = 0xc0000, scoped, tag = 'input window, operand 2, single buffered']
    #allocation5 [shape = 's32[1]{0}', space=sflag, size = 0x4, scoped, tag = 'scoped memory for actor_critic_forward.1']
    #allocation6 [shape = 'u8[131072]{0}', space=vmem, size = 0x20000, scoped, tag = 'input window, operand 3, single buffered']
    %10 = vsyncpa [#allocation3], 0
    %11 = vsyncpa [#allocation5], 0
    // Predicated region
    $region2: #{actor_critic_forward.1} parent=1 // pred_check
      _
    $region3: #{actor_critic_forward.1} parent=1 // pred_check_branch
      %13 = sbr.rel (0) target = $region5
    $region4: #{actor_critic_forward.1} parent=1 // pred_region
      _
    $region5: #{actor_critic_forward.1} parent=1 // pred_fallthru
      _
    // Predicated region
    $region6: #{actor_critic_forward.1} parent=1 // pred_check
      _
    $region7: #{actor_critic_forward.1} parent=1 // pred_check_branch
      %15 = sbr.rel (0) target = $region9
    $region8: #{actor_critic_forward.1} parent=1 // pred_region
      %s17 = ssub.s32 6144, 6144
      %18 = vsyncadd [#allocation3], %s17
      %s19 = sshll.u32 [#allocation2], 4
      %s20 = int_to_ptr.vmem [resolvable:$true] %s19
      %25 = dma.hbm_to_vmem [thread:$0]  %s1, 6144, %s20, [#allocation3], 128, 128, 8
    $region9: #{actor_critic_forward.1} parent=1 // pred_fallthru
      _
    // Predicated region
    $region10: #{actor_critic_forward.1} parent=1 // pred_check
      _
    $region11: #{actor_critic_forward.1} parent=1 // pred_check_branch
      %27 = sbr.rel (0) target = $region13
    $region12: #{actor_critic_forward.1} parent=1 // pred_region
      %s29 = ssub.s32 24576, 24576
      %30 = vsyncadd [#allocation5], %s29
      %s31 = sshll.u32 [#allocation4], 4
      %s32 = int_to_ptr.vmem [resolvable:$true] %s31
      %37 = dma.hbm_to_vmem [thread:$0]  %s2, 24576, %s32, [#allocation5], 128, 128, 8
    $region13: #{actor_critic_forward.1} parent=1 // pred_fallthru
      _
    // Predicated region
    $region14: #{actor_critic_forward.1} parent=1 // pred_check
      _
    $region15: #{actor_critic_forward.1} parent=1 // pred_check_branch
      %39 = sbr.rel (0) target = $region17
    $region16: #{actor_critic_forward.1} parent=1 // pred_region
      %s41 = ssub.s32 4096, 4096
      %42 = vsyncadd [#allocation5], %s41
      %s43 = sshll.u32 [#allocation6], 4
      %s44 = int_to_ptr.vmem [resolvable:$true] %s43
      %49 = dma.hbm_to_vmem [thread:$0]  %s3, 4096, %s44, [#allocation5], 64, 64, 4
    $region17: #{actor_critic_forward.1} parent=1 // pred_fallthru
      _
    // Predicated region
    $region18: #{actor_critic_forward.1} parent=1 // pred_check
      _
    $region19: #{actor_critic_forward.1} parent=1 // pred_check_branch
      %51 = sbr.rel (0) target = $region21
    $region20: #{actor_critic_forward.1} parent=1 // pred_region
      _
    $region21: #{actor_critic_forward.1} parent=1 // pred_fallthru
      _
    // Predicated region
    $region22: #{actor_critic_forward.1} parent=1 // pred_check
      _
    $region23: #{actor_critic_forward.1} parent=1 // pred_check_branch
      %53 = sbr.rel (0) target = $region25
    $region24: #{actor_critic_forward.1} parent=1 // pred_region
      %54 = dma.done [#allocation3], 6144
    $region25: #{actor_critic_forward.1} parent=1 // pred_fallthru
      _
    // Predicated region
    $region26: #{actor_critic_forward.1} parent=1 // pred_check
      _
    $region27: #{actor_critic_forward.1} parent=1 // pred_check_branch
      %56 = sbr.rel (0) target = $region29
    $region28: #{actor_critic_forward.1} parent=1 // pred_region
      %57 = dma.done [#allocation5], 24576
    $region29: #{actor_critic_forward.1} parent=1 // pred_fallthru
      _
    // Predicated region
    $region30: #{actor_critic_forward.1} parent=1 // pred_check
      _
    $region31: #{actor_critic_forward.1} parent=1 // pred_check_branch
      %59 = sbr.rel (0) target = $region33
    $region32: #{actor_critic_forward.1} parent=1 // pred_region
      %60 = dma.done [#allocation5], 4096
    $region33: #{actor_critic_forward.1} parent=1 // pred_fallthru
      _
    %v62 = vld [vmem:[%s0] sm:$0xff]
    %v63 = vpack.c.bf16 %v62, %v62
    %v64 = vld [vmem:[#allocation2] sm:$0xff]
    %v65 = vld [vmem:[#allocation2 + $0x8] sm:$0xff]
    %v66 = vld [vmem:[#allocation2 + $0x10] sm:$0xff]
    %v67 = vld [vmem:[#allocation2 + $0x18] sm:$0xff]
    %v68 = vld [vmem:[#allocation2 + $0x20] sm:$0xff]
    %v69 = vld [vmem:[#allocation2 + $0x28] sm:$0xff]
    %v70 = vld [vmem:[#allocation2 + $0x30] sm:$0xff]
    %v71 = vld [vmem:[#allocation2 + $0x38] sm:$0xff]
    %v72 = vld [vmem:[#allocation2 + $0x40] sm:$0xff]
    %v73 = vld [vmem:[#allocation2 + $0x48] sm:$0xff]
    %v74 = vld [vmem:[#allocation2 + $0x50] sm:$0xff]
    %v75 = vld [vmem:[#allocation2 + $0x58] sm:$0xff]
    %v76 = vld [vmem:[#allocation2 + $0x60] sm:$0xff]
    %v77 = vld [vmem:[#allocation2 + $0x68] sm:$0xff]
    %v78 = vld [vmem:[#allocation2 + $0x70] sm:$0xff]
    %v79 = vld [vmem:[#allocation2 + $0x78] sm:$0xff]
    %v80 = vld [vmem:[%s4] ss:$8 sm:$0x3]
    %v82 = vlaneseq
    %v83 = vshrl.u32 %v82, 7
    %v84 = vsub.s32 0, %v83
    %v85 = vrot.slane %v80, %v84
    %v86 = vlaneseq
    %v87 = vshrl.u32 %v86, 7
    %v88 = vsub.s32 1, %v87
    %v89 = vrot.slane %v80, %v88
    %v108 = vunpack.c.l.b16 %v64
    %v109 = vunpack.c.h.b16 %v64
    %v110 = vunpack.c.l.b16 %v65
    %v111 = vunpack.c.h.b16 %v65
    %v112 = vunpack.c.l.b16 %v66
    %v113 = vunpack.c.h.b16 %v66
    %v114 = vunpack.c.l.b16 %v67
    %v115 = vunpack.c.h.b16 %v67
    %v116 = vunpack.c.l.b16 %v68
    %v117 = vunpack.c.h.b16 %v68
    %v118 = vunpack.c.l.b16 %v69
    %v119 = vunpack.c.h.b16 %v69
    %v120 = vunpack.c.l.b16 %v70
    %v121 = vunpack.c.h.b16 %v70
    %v122 = vunpack.c.l.b16 %v71
    %v123 = vunpack.c.h.b16 %v71
    %v124 = vunpack.c.l.b16 %v72
    %v125 = vunpack.c.h.b16 %v72
    %v126 = vunpack.c.l.b16 %v73
    %v127 = vunpack.c.h.b16 %v73
    %v128 = vunpack.c.l.b16 %v74
    %v129 = vunpack.c.h.b16 %v74
    %v130 = vunpack.c.l.b16 %v75
    %v131 = vunpack.c.h.b16 %v75
    %v132 = vunpack.c.l.b16 %v76
    %v133 = vunpack.c.h.b16 %v76
    %v134 = vunpack.c.l.b16 %v77
    %v135 = vunpack.c.h.b16 %v77
    %v136 = vunpack.c.l.b16 %v78
    %v137 = vunpack.c.h.b16 %v78
    %v138 = vunpack.c.l.b16 %v79
    %v139 = vunpack.c.h.b16 %v79
    %v140 = vpack.c.b16 %v110, %v108
    %v141 = vpack.c.b16 %v111, %v109
    %v142 = vpack.c.b16 %v114, %v112
    %v143 = vpack.c.b16 %v115, %v113
    %v144 = vpack.c.b16 %v118, %v116
    %v145 = vpack.c.b16 %v119, %v117
    %v146 = vpack.c.b16 %v122, %v120
    %v147 = vpack.c.b16 %v123, %v121
    %v148 = vpack.c.b16 %v126, %v124
    %v149 = vpack.c.b16 %v127, %v125
    %v150 = vpack.c.b16 %v130, %v128
    %v151 = vpack.c.b16 %v131, %v129
    %v152 = vpack.c.b16 %v134, %v132
    %v153 = vpack.c.b16 %v135, %v133
    %v154 = vpack.c.b16 %v138, %v136
    %v155 = vpack.c.b16 %v139, %v137
    %172 = vmatprep.subr.bf16.mxu0 %v141
    %173 = vmatpush1.bf16.msra.mxu0 %v140
    %174 = vmatprep.subr.bf16.mxu0 %v143
    %175 = vmatpush1.bf16.msra.mxu0 %v142
    %176 = vmatprep.subr.bf16.mxu0 %v145
    %177 = vmatpush1.bf16.msra.mxu0 %v144
    %178 = vmatprep.subr.bf16.mxu0 %v147
    %179 = vmatpush1.bf16.msra.mxu0 %v146
    %180 = vmatprep.subr.bf16.mxu0 %v149
    %181 = vmatpush1.bf16.msra.mxu0 %v148
    %182 = vmatprep.subr.bf16.mxu0 %v151
    %183 = vmatpush1.bf16.msra.mxu0 %v150
    %184 = vmatprep.subr.bf16.mxu0 %v153
    %185 = vmatpush1.bf16.msra.mxu0 %v152
    %186 = vmatprep.subr.bf16.mxu0 %v155
    %187 = vmatpush1.bf16.msra.mxu0 %v154
    %188 = vmatprep.subr.bf16.mxu0 0
    %189 = vmatpush1.bf16.msra.mxu0 0
    %190 = vmatprep.subr.bf16.mxu0 0
    %191 = vmatpush1.bf16.msra.mxu0 0
    %192 = vmatprep.subr.bf16.mxu0 0
    %193 = vmatpush1.bf16.msra.mxu0 0
    %194 = vmatprep.subr.bf16.mxu0 0
    %195 = vmatpush1.bf16.msra.mxu0 0
    %196 = vmatprep.subr.bf16.mxu0 0
    %197 = vmatpush1.bf16.msra.mxu0 0
    %198 = vmatprep.subr.bf16.mxu0 0
    %199 = vmatpush1.bf16.msra.mxu0 0
    %200 = vmatprep.subr.bf16.mxu0 0
    %201 = vmatpush1.bf16.msra.mxu0 0
    %202 = vmatprep.subr.bf16.mxu0 0
    %203 = vmatpush1.bf16.msra.mxu0 0
    %204 = vmatprep.mubr.bf16.mxu0 0
    %205 = vmatmul.mubr.bf16.gmra.mrb[0].mxu0 %v63
    %v206 = vpop.f32.mrb[0].mxu0
    %v207 = vadd.f32 %v85, %v206
    %v208 = vpop.f32.mrb[0].mxu0
    %v209 = vadd.f32 %v89, %v208
    %v210 = vpop.f32.mrb[0].mxu0
    %v211 = vpop.f32.mrb[0].mxu0
    %212 = vdwg.mxu0
    %vm213 = vcmp.gt.f32.partialorder %v207, 0.0
    %vm214 = vcmp.gt.f32.partialorder %v209, 0.0
    %v215 = vmin.f32 %v207, 0.0
    %v216 = vmin.f32 %v209, 0.0
    %v217 = vmul.f32 %v215, 1.442695
    %v218 = vpow.pop %v217
    %v219 = vmul.f32 %v216, 1.442695
    %v220 = vpow.pop %v219
    %v221 = vsub.f32 %v218, 1.0
    %v222 = vsub.f32 %v220, 1.0
    %v223 = vsel %vm213, %v207, %v221
    %v224 = vsel %vm214, %v209, %v222
    %v225 = vpack.c.bf16 %v223, %v223
    %v226 = vpack.c.bf16 %v224, %v224
    %v227 = vld [vmem:[#allocation4] sm:$0xff]
    %v228 = vld [vmem:[#allocation4 + $0x8] sm:$0xff]
    %v229 = vld [vmem:[#allocation4 + $0x10] sm:$0xff]
    %v230 = vld [vmem:[#allocation4 + $0x18] sm:$0xff]
    %v231 = vld [vmem:[#allocation4 + $0x20] sm:$0xff]
    %v232 = vld [vmem:[#allocation4 + $0x28] sm:$0xff]
    %v233 = vld [vmem:[#allocation4 + $0x30] sm:$0xff]
    %v234 = vld [vmem:[#allocation4 + $0x38] sm:$0xff]
    %v235 = vld [vmem:[#allocation4 + $0x40] sm:$0xff]
    %v236 = vld [vmem:[#allocation4 + $0x48] sm:$0xff]
    %v237 = vld [vmem:[#allocation4 + $0x50] sm:$0xff]
    %v238 = vld [vmem:[#allocation4 + $0x58] sm:$0xff]
    %v239 = vld [vmem:[#allocation4 + $0x60] sm:$0xff]
    %v240 = vld [vmem:[#allocation4 + $0x68] sm:$0xff]
    %v241 = vld [vmem:[#allocation4 + $0x70] sm:$0xff]
    %v242 = vld [vmem:[#allocation4 + $0x78] sm:$0xff]
    %v243 = vld [vmem:[#allocation4 + $0x80] sm:$0xff]
    %v244 = vld [vmem:[#allocation4 + $0x88] sm:$0xff]
    %v245 = vld [vmem:[#allocation4 + $0x90] sm:$0xff]
    %v246 = vld [vmem:[#allocation4 + $0x98] sm:$0xff]
    %v247 = vld [vmem:[#allocation4 + $0xa0] sm:$0xff]
    %v248 = vld [vmem:[#allocation4 + $0xa8] sm:$0xff]
    %v249 = vld [vmem:[#allocation4 + $0xb0] sm:$0xff]
    %v250 = vld [vmem:[#allocation4 + $0xb8] sm:$0xff]
    %v251 = vld [vmem:[#allocation4 + $0xc0] sm:$0xff]
    %v252 = vld [vmem:[#allocation4 + $0xc8] sm:$0xff]
    %v253 = vld [vmem:[#allocation4 + $0xd0] sm:$0xff]
    %v254 = vld [vmem:[#allocation4 + $0xd8] sm:$0xff]
    %v255 = vld [vmem:[#allocation4 + $0xe0] sm:$0xff]
    %v256 = vld [vmem:[#allocation4 + $0xe8] sm:$0xff]
    %v257 = vld [vmem:[#allocation4 + $0xf0] sm:$0xff]
    %v258 = vld [vmem:[#allocation4 + $0xf8] sm:$0xff]
    %s259 = scalar_lea.vmem %s4, 1
    %v260 = vld [vmem:[%s259] ss:$8 sm:$0x3]
    %v262 = vlaneseq
    %v263 = vshrl.u32 %v262, 7
    %v264 = vsub.s32 0, %v263
    %v265 = vrot.slane %v260, %v264
    %v266 = vlaneseq
    %v267 = vshrl.u32 %v266, 7
    %v268 = vsub.s32 1, %v267
    %v269 = vrot.slane %v260, %v268
    %v304 = vunpack.c.l.b16 %v227
    %v305 = vunpack.c.h.b16 %v227
    %v306 = vunpack.c.l.b16 %v228
    %v307 = vunpack.c.h.b16 %v228
    %v308 = vunpack.c.l.b16 %v229
    %v309 = vunpack.c.h.b16 %v229
    %v310 = vunpack.c.l.b16 %v230
    %v311 = vunpack.c.h.b16 %v230
    %v312 = vunpack.c.l.b16 %v231
    %v313 = vunpack.c.h.b16 %v231
    %v314 = vunpack.c.l.b16 %v232
    %v315 = vunpack.c.h.b16 %v232
    %v316 = vunpack.c.l.b16 %v233
    %v317 = vunpack.c.h.b16 %v233
    %v318 = vunpack.c.l.b16 %v234
    %v319 = vunpack.c.h.b16 %v234
    %v320 = vunpack.c.l.b16 %v235
    %v321 = vunpack.c.h.b16 %v235
    %v322 = vunpack.c.l.b16 %v236
    %v323 = vunpack.c.h.b16 %v236
    %v324 = vunpack.c.l.b16 %v237
    %v325 = vunpack.c.h.b16 %v237
    %v326 = vunpack.c.l.b16 %v238
    %v327 = vunpack.c.h.b16 %v238
    %v328 = vunpack.c.l.b16 %v239
    %v329 = vunpack.c.h.b16 %v239
    %v330 = vunpack.c.l.b16 %v240
    %v331 = vunpack.c.h.b16 %v240
    %v332 = vunpack.c.l.b16 %v241
    %v333 = vunpack.c.h.b16 %v241
    %v334 = vunpack.c.l.b16 %v242
    %v335 = vunpack.c.h.b16 %v242
    %v336 = vunpack.c.l.b16 %v243
    %v337 = vunpack.c.h.b16 %v243
    %v338 = vunpack.c.l.b16 %v244
    %v339 = vunpack.c.h.b16 %v244
    %v340 = vunpack.c.l.b16 %v245
    %v341 = vunpack.c.h.b16 %v245
    %v342 = vunpack.c.l.b16 %v246
    %v343 = vunpack.c.h.b16 %v246
    %v344 = vunpack.c.l.b16 %v247
    %v345 = vunpack.c.h.b16 %v247
    %v346 = vunpack.c.l.b16 %v248
    %v347 = vunpack.c.h.b16 %v248
    %v348 = vunpack.c.l.b16 %v249
    %v349 = vunpack.c.h.b16 %v249
    %v350 = vunpack.c.l.b16 %v250
    %v351 = vunpack.c.h.b16 %v250
    %v352 = vunpack.c.l.b16 %v251
    %v353 = vunpack.c.h.b16 %v251
    %v354 = vunpack.c.l.b16 %v252
    %v355 = vunpack.c.h.b16 %v252
    %v356 = vunpack.c.l.b16 %v253
    %v357 = vunpack.c.h.b16 %v253
    %v358 = vunpack.c.l.b16 %v254
    %v359 = vunpack.c.h.b16 %v254
    %v360 = vunpack.c.l.b16 %v255
    %v361 = vunpack.c.h.b16 %v255
    %v362 = vunpack.c.l.b16 %v256
    %v363 = vunpack.c.h.b16 %v256
    %v364 = vunpack.c.l.b16 %v257
    %v365 = vunpack.c.h.b16 %v257
    %v366 = vunpack.c.l.b16 %v258
    %v367 = vunpack.c.h.b16 %v258
    %v368 = vpack.c.b16 %v306, %v304
    %v369 = vpack.c.b16 %v307, %v305
    %v370 = vpack.c.b16 %v310, %v308
    %v371 = vpack.c.b16 %v311, %v309
    %v372 = vpack.c.b16 %v314, %v312
    %v373 = vpack.c.b16 %v315, %v313
    %v374 = vpack.c.b16 %v318, %v316
    %v375 = vpack.c.b16 %v319, %v317
    %v376 = vpack.c.b16 %v322, %v320
    %v377 = vpack.c.b16 %v323, %v321
    %v378 = vpack.c.b16 %v326, %v324
    %v379 = vpack.c.b16 %v327, %v325
    %v380 = vpack.c.b16 %v330, %v328
    %v381 = vpack.c.b16 %v331, %v329
    %v382 = vpack.c.b16 %v334, %v332
    %v383 = vpack.c.b16 %v335, %v333
    %v384 = vpack.c.b16 %v338, %v336
    %v385 = vpack.c.b16 %v339, %v337
    %v386 = vpack.c.b16 %v342, %v340
    %v387 = vpack.c.b16 %v343, %v341
    %v388 = vpack.c.b16 %v346, %v344
    %v389 = vpack.c.b16 %v347, %v345
    %v390 = vpack.c.b16 %v350, %v348
    %v391 = vpack.c.b16 %v351, %v349
    %v392 = vpack.c.b16 %v354, %v352
    %v393 = vpack.c.b16 %v355, %v353
    %v394 = vpack.c.b16 %v358, %v356
    %v395 = vpack.c.b16 %v359, %v357
    %v396 = vpack.c.b16 %v362, %v360
    %v397 = vpack.c.b16 %v363, %v361
    %v398 = vpack.c.b16 %v366, %v364
    %v399 = vpack.c.b16 %v367, %v365
    %432 = vmatprep.subr.bf16.mxu0 %v369
    %433 = vmatpush1.bf16.msra.mxu0 %v368
    %434 = vmatprep.subr.bf16.mxu0 %v371
    %435 = vmatpush1.bf16.msra.mxu0 %v370
    %436 = vmatprep.subr.bf16.mxu0 %v373
    %437 = vmatpush1.bf16.msra.mxu0 %v372
    %438 = vmatprep.subr.bf16.mxu0 %v375
    %439 = vmatpush1.bf16.msra.mxu0 %v374
    %440 = vmatprep.subr.bf16.mxu0 %v377
    %441 = vmatpush1.bf16.msra.mxu0 %v376
    %442 = vmatprep.subr.bf16.mxu0 %v379
    %443 = vmatpush1.bf16.msra.mxu0 %v378
    %444 = vmatprep.subr.bf16.mxu0 %v381
    %445 = vmatpush1.bf16.msra.mxu0 %v380
    %446 = vmatprep.subr.bf16.mxu0 %v383
    %447 = vmatpush1.bf16.msra.mxu0 %v382
    %448 = vmatprep.subr.bf16.mxu0 %v385
    %449 = vmatpush1.bf16.msra.mxu0 %v384
    %450 = vmatprep.subr.bf16.mxu0 %v387
    %451 = vmatpush1.bf16.msra.mxu0 %v386
    %452 = vmatprep.subr.bf16.mxu0 %v389
    %453 = vmatpush1.bf16.msra.mxu0 %v388
    %454 = vmatprep.subr.bf16.mxu0 %v391
    %455 = vmatpush1.bf16.msra.mxu0 %v390
    %456 = vmatprep.subr.bf16.mxu0 %v393
    %457 = vmatpush1.bf16.msra.mxu0 %v392
    %458 = vmatprep.subr.bf16.mxu0 %v395
    %459 = vmatpush1.bf16.msra.mxu0 %v394
    %460 = vmatprep.subr.bf16.mxu0 %v397
    %461 = vmatpush1.bf16.msra.mxu0 %v396
    %462 = vmatprep.subr.bf16.mxu0 %v399
    %463 = vmatpush1.bf16.msra.mxu0 %v398
    %464 = vmatprep.mubr.bf16.mxu0 %v226
    %465 = vmatmul.mubr.bf16.gmra.mrb[0].mxu0 %v225
    %v466 = vpop.f32.mrb[0].mxu0
    %v467 = vadd.f32 %v265, %v466
    %v468 = vpop.f32.mrb[0].mxu0
    %v469 = vadd.f32 %v269, %v468
    %v470 = vpop.f32.mrb[0].mxu0
    %v471 = vpop.f32.mrb[0].mxu0
    %472 = vdwg.mxu0
    %vm473 = vcmp.gt.f32.partialorder %v467, 0.0
    %vm474 = vcmp.gt.f32.partialorder %v469, 0.0
    %v475 = vmin.f32 %v467, 0.0
    %v476 = vmin.f32 %v469, 0.0
    %v477 = vmul.f32 %v475, 1.442695
    %v478 = vpow.pop %v477
    %v479 = vmul.f32 %v476, 1.442695
    %v480 = vpow.pop %v479
    %v481 = vsub.f32 %v478, 1.0
    %v482 = vsub.f32 %v480, 1.0
    %v483 = vsel %vm473, %v467, %v481
    %v484 = vsel %vm474, %v469, %v482
    %v485 = vpack.c.bf16 %v483, %v483
    %v486 = vpack.c.bf16 %v484, %v484
    %s487 = scalar_lea.vmem [#allocation4], 256
    %v488 = vld [vmem:[%s487] sm:$0xff]
    %v489 = vld [vmem:[%s487 + $0x8] sm:$0xff]
    %v490 = vld [vmem:[%s487 + $0x10] sm:$0xff]
    %v491 = vld [vmem:[%s487 + $0x18] sm:$0xff]
    %v492 = vld [vmem:[%s487 + $0x20] sm:$0xff]
    %v493 = vld [vmem:[%s487 + $0x28] sm:$0xff]
    %v494 = vld [vmem:[%s487 + $0x30] sm:$0xff]
    %v495 = vld [vmem:[%s487 + $0x38] sm:$0xff]
    %v496 = vld [vmem:[%s487 + $0x40] sm:$0xff]
    %v497 = vld [vmem:[%s487 + $0x48] sm:$0xff]
    %v498 = vld [vmem:[%s487 + $0x50] sm:$0xff]
    %v499 = vld [vmem:[%s487 + $0x58] sm:$0xff]
    %v500 = vld [vmem:[%s487 + $0x60] sm:$0xff]
    %v501 = vld [vmem:[%s487 + $0x68] sm:$0xff]
    %v502 = vld [vmem:[%s487 + $0x70] sm:$0xff]
    %v503 = vld [vmem:[%s487 + $0x78] sm:$0xff]
    %v504 = vld [vmem:[%s487 + $0x80] sm:$0xff]
    %v505 = vld [vmem:[%s487 + $0x88] sm:$0xff]
    %v506 = vld [vmem:[%s487 + $0x90] sm:$0xff]
    %v507 = vld [vmem:[%s487 + $0x98] sm:$0xff]
    %v508 = vld [vmem:[%s487 + $0xa0] sm:$0xff]
    %v509 = vld [vmem:[%s487 + $0xa8] sm:$0xff]
    %v510 = vld [vmem:[%s487 + $0xb0] sm:$0xff]
    %v511 = vld [vmem:[%s487 + $0xb8] sm:$0xff]
    %v512 = vld [vmem:[%s487 + $0xc0] sm:$0xff]
    %v513 = vld [vmem:[%s487 + $0xc8] sm:$0xff]
    %v514 = vld [vmem:[%s487 + $0xd0] sm:$0xff]
    %v515 = vld [vmem:[%s487 + $0xd8] sm:$0xff]
    %v516 = vld [vmem:[%s487 + $0xe0] sm:$0xff]
    %v517 = vld [vmem:[%s487 + $0xe8] sm:$0xff]
    %v518 = vld [vmem:[%s487 + $0xf0] sm:$0xff]
    %v519 = vld [vmem:[%s487 + $0xf8] sm:$0xff]
    %s520 = scalar_lea.vmem [#allocation2], 128
    %v521 = vld [vmem:[%s520] sm:$0xff]
    %v522 = vld [vmem:[%s520 + $0x8] sm:$0xff]
    %v523 = vld [vmem:[%s520 + $0x10] sm:$0xff]
    %v524 = vld [vmem:[%s520 + $0x18] sm:$0xff]
    %v525 = vld [vmem:[%s520 + $0x20] sm:$0xff]
    %v526 = vld [vmem:[%s520 + $0x28] sm:$0xff]
    %v527 = vld [vmem:[%s520 + $0x30] sm:$0xff]
    %v528 = vld [vmem:[%s520 + $0x38] sm:$0xff]
    %v529 = vld [vmem:[%s520 + $0x40] sm:$0xff]
    %v530 = vld [vmem:[%s520 + $0x48] sm:$0xff]
    %v531 = vld [vmem:[%s520 + $0x50] sm:$0xff]
    %v532 = vld [vmem:[%s520 + $0x58] sm:$0xff]
    %v533 = vld [vmem:[%s520 + $0x60] sm:$0xff]
    %v534 = vld [vmem:[%s520 + $0x68] sm:$0xff]
    %v535 = vld [vmem:[%s520 + $0x70] sm:$0xff]
    %v536 = vld [vmem:[%s520 + $0x78] sm:$0xff]
    %v553 = vunpack.c.l.b16 %v521
    %v554 = vunpack.c.h.b16 %v521
    %v555 = vunpack.c.l.b16 %v522
    %v556 = vunpack.c.h.b16 %v522
    %v557 = vunpack.c.l.b16 %v523
    %v558 = vunpack.c.h.b16 %v523
    %v559 = vunpack.c.l.b16 %v524
    %v560 = vunpack.c.h.b16 %v524
    %v561 = vunpack.c.l.b16 %v525
    %v562 = vunpack.c.h.b16 %v525
    %v563 = vunpack.c.l.b16 %v526
    %v564 = vunpack.c.h.b16 %v526
    %v565 = vunpack.c.l.b16 %v527
    %v566 = vunpack.c.h.b16 %v527
    %v567 = vunpack.c.l.b16 %v528
    %v568 = vunpack.c.h.b16 %v528
    %v569 = vunpack.c.l.b16 %v529
    %v570 = vunpack.c.h.b16 %v529
    %v571 = vunpack.c.l.b16 %v530
    %v572 = vunpack.c.h.b16 %v530
    %v573 = vunpack.c.l.b16 %v531
    %v574 = vunpack.c.h.b16 %v531
    %v575 = vunpack.c.l.b16 %v532
    %v576 = vunpack.c.h.b16 %v532
    %v577 = vunpack.c.l.b16 %v533
    %v578 = vunpack.c.h.b16 %v533
    %v579 = vunpack.c.l.b16 %v534
    %v580 = vunpack.c.h.b16 %v534
    %v581 = vunpack.c.l.b16 %v535
    %v582 = vunpack.c.h.b16 %v535
    %v583 = vunpack.c.l.b16 %v536
    %v584 = vunpack.c.h.b16 %v536
    %v585 = vpack.c.b16 %v555, %v553
    %v586 = vpack.c.b16 %v556, %v554
    %v587 = vpack.c.b16 %v559, %v557
    %v588 = vpack.c.b16 %v560, %v558
    %v589 = vpack.c.b16 %v563, %v561
    %v590 = vpack.c.b16 %v564, %v562
    %v591 = vpack.c.b16 %v567, %v565
    %v592 = vpack.c.b16 %v568, %v566
    %v593 = vpack.c.b16 %v571, %v569
    %v594 = vpack.c.b16 %v572, %v570
    %v595 = vpack.c.b16 %v575, %v573
    %v596 = vpack.c.b16 %v576, %v574
    %v597 = vpack.c.b16 %v579, %v577
    %v598 = vpack.c.b16 %v580, %v578
    %v599 = vpack.c.b16 %v583, %v581
    %v600 = vpack.c.b16 %v584, %v582
    %617 = vmatprep.subr.bf16.mxu0 %v586
    %618 = vmatpush1.bf16.msra.mxu0 %v585
    %619 = vmatprep.subr.bf16.mxu0 %v588
    %620 = vmatpush1.bf16.msra.mxu0 %v587
    %621 = vmatprep.subr.bf16.mxu0 %v590
    %622 = vmatpush1.bf16.msra.mxu0 %v589
    %623 = vmatprep.subr.bf16.mxu0 %v592
    %624 = vmatpush1.bf16.msra.mxu0 %v591
    %625 = vmatprep.subr.bf16.mxu0 %v594
    %626 = vmatpush1.bf16.msra.mxu0 %v593
    %627 = vmatprep.subr.bf16.mxu0 %v596
    %628 = vmatpush1.bf16.msra.mxu0 %v595
    %629 = vmatprep.subr.bf16.mxu0 %v598
    %630 = vmatpush1.bf16.msra.mxu0 %v597
    %631 = vmatprep.subr.bf16.mxu0 %v600
    %632 = vmatpush1.bf16.msra.mxu0 %v599
    %633 = vmatprep.subr.bf16.mxu0 0
    %634 = vmatpush1.bf16.msra.mxu0 0
    %635 = vmatprep.subr.bf16.mxu0 0
    %636 = vmatpush1.bf16.msra.mxu0 0
    %637 = vmatprep.subr.bf16.mxu0 0
    %638 = vmatpush1.bf16.msra.mxu0 0
    %639 = vmatprep.subr.bf16.mxu0 0
    %640 = vmatpush1.bf16.msra.mxu0 0
    %641 = vmatprep.subr.bf16.mxu0 0
    %642 = vmatpush1.bf16.msra.mxu0 0
    %643 = vmatprep.subr.bf16.mxu0 0
    %644 = vmatpush1.bf16.msra.mxu0 0
    %645 = vmatprep.subr.bf16.mxu0 0
    %646 = vmatpush1.bf16.msra.mxu0 0
    %647 = vmatprep.subr.bf16.mxu0 0
    %648 = vmatpush1.bf16.msra.mxu0 0
    %649 = vmatprep.mubr.bf16.mxu0 0
    %650 = vmatmul.mubr.bf16.gmra.mrb[0].mxu0 %v63
    %v651 = vpop.f32.mrb[0].mxu0
    %v652 = vadd.f32 0.0, %v651
    %v653 = vpop.f32.mrb[0].mxu0
    %v654 = vadd.f32 0.0, %v653
    %v655 = vpop.f32.mrb[0].mxu0
    %v656 = vpop.f32.mrb[0].mxu0
    %657 = vdwg.mxu0
    %v690 = vunpack.c.l.b16 %v488
    %v691 = vunpack.c.h.b16 %v488
    %v692 = vunpack.c.l.b16 %v489
    %v693 = vunpack.c.h.b16 %v489
    %v694 = vunpack.c.l.b16 %v490
    %v695 = vunpack.c.h.b16 %v490
    %v696 = vunpack.c.l.b16 %v491
    %v697 = vunpack.c.h.b16 %v491
    %v698 = vunpack.c.l.b16 %v492
    %v699 = vunpack.c.h.b16 %v492
    %v700 = vunpack.c.l.b16 %v493
    %v701 = vunpack.c.h.b16 %v493
    %v702 = vunpack.c.l.b16 %v494
    %v703 = vunpack.c.h.b16 %v494
    %v704 = vunpack.c.l.b16 %v495
    %v705 = vunpack.c.h.b16 %v495
    %v706 = vunpack.c.l.b16 %v496
    %v707 = vunpack.c.h.b16 %v496
    %v708 = vunpack.c.l.b16 %v497
    %v709 = vunpack.c.h.b16 %v497
    %v710 = vunpack.c.l.b16 %v498
    %v711 = vunpack.c.h.b16 %v498
    %v712 = vunpack.c.l.b16 %v499
    %v713 = vunpack.c.h.b16 %v499
    %v714 = vunpack.c.l.b16 %v500
    %v715 = vunpack.c.h.b16 %v500
    %v716 = vunpack.c.l.b16 %v501
    %v717 = vunpack.c.h.b16 %v501
    %v718 = vunpack.c.l.b16 %v502
    %v719 = vunpack.c.h.b16 %v502
    %v720 = vunpack.c.l.b16 %v503
    %v721 = vunpack.c.h.b16 %v503
    %v722 = vunpack.c.l.b16 %v504
    %v723 = vunpack.c.h.b16 %v504
    %v724 = vunpack.c.l.b16 %v505
    %v725 = vunpack.c.h.b16 %v505
    %v726 = vunpack.c.l.b16 %v506
    %v727 = vunpack.c.h.b16 %v506
    %v728 = vunpack.c.l.b16 %v507
    %v729 = vunpack.c.h.b16 %v507
    %v730 = vunpack.c.l.b16 %v508
    %v731 = vunpack.c.h.b16 %v508
    %v732 = vunpack.c.l.b16 %v509
    %v733 = vunpack.c.h.b16 %v509
    %v734 = vunpack.c.l.b16 %v510
    %v735 = vunpack.c.h.b16 %v510
    %v736 = vunpack.c.l.b16 %v511
    %v737 = vunpack.c.h.b16 %v511
    %v738 = vunpack.c.l.b16 %v512
    %v739 = vunpack.c.h.b16 %v512
    %v740 = vunpack.c.l.b16 %v513
    %v741 = vunpack.c.h.b16 %v513
    %v742 = vunpack.c.l.b16 %v514
    %v743 = vunpack.c.h.b16 %v514
    %v744 = vunpack.c.l.b16 %v515
    %v745 = vunpack.c.h.b16 %v515
    %v746 = vunpack.c.l.b16 %v516
    %v747 = vunpack.c.h.b16 %v516
    %v748 = vunpack.c.l.b16 %v517
    %v749 = vunpack.c.h.b16 %v517
    %v750 = vunpack.c.l.b16 %v518
    %v751 = vunpack.c.h.b16 %v518
    %v752 = vunpack.c.l.b16 %v519
    %v753 = vunpack.c.h.b16 %v519
    %v754 = vpack.c.b16 %v692, %v690
    %v755 = vpack.c.b16 %v693, %v691
    %v756 = vpack.c.b16 %v696, %v694
    %v757 = vpack.c.b16 %v697, %v695
    %v758 = vpack.c.b16 %v700, %v698
    %v759 = vpack.c.b16 %v701, %v699
    %v760 = vpack.c.b16 %v704, %v702
    %v761 = vpack.c.b16 %v705, %v703
    %v762 = vpack.c.b16 %v708, %v706
    %v763 = vpack.c.b16 %v709, %v707
    %v764 = vpack.c.b16 %v712, %v710
    %v765 = vpack.c.b16 %v713, %v711
    %v766 = vpack.c.b16 %v716, %v714
    %v767 = vpack.c.b16 %v717, %v715
    %v768 = vpack.c.b16 %v720, %v718
    %v769 = vpack.c.b16 %v721, %v719
    %v770 = vpack.c.b16 %v724, %v722
    %v771 = vpack.c.b16 %v725, %v723
    %v772 = vpack.c.b16 %v728, %v726
    %v773 = vpack.c.b16 %v729, %v727
    %v774 = vpack.c.b16 %v732, %v730
    %v775 = vpack.c.b16 %v733, %v731
    %v776 = vpack.c.b16 %v736, %v734
    %v777 = vpack.c.b16 %v737, %v735
    %v778 = vpack.c.b16 %v740, %v738
    %v779 = vpack.c.b16 %v741, %v739
    %v780 = vpack.c.b16 %v744, %v742
    %v781 = vpack.c.b16 %v745, %v743
    %v782 = vpack.c.b16 %v748, %v746
    %v783 = vpack.c.b16 %v749, %v747
    %v784 = vpack.c.b16 %v752, %v750
    %v785 = vpack.c.b16 %v753, %v751
    %818 = vmatprep.subr.bf16.mxu0 %v755
    %819 = vmatpush1.bf16.msra.mxu0 %v754
    %820 = vmatprep.subr.bf16.mxu0 %v757
    %821 = vmatpush1.bf16.msra.mxu0 %v756
    %822 = vmatprep.subr.bf16.mxu0 %v759
    %823 = vmatpush1.bf16.msra.mxu0 %v758
    %824 = vmatprep.subr.bf16.mxu0 %v761
    %825 = vmatpush1.bf16.msra.mxu0 %v760
    %826 = vmatprep.subr.bf16.mxu0 %v763
    %827 = vmatpush1.bf16.msra.mxu0 %v762
    %828 = vmatprep.subr.bf16.mxu0 %v765
    %829 = vmatpush1.bf16.msra.mxu0 %v764
    %830 = vmatprep.subr.bf16.mxu0 %v767
    %831 = vmatpush1.bf16.msra.mxu0 %v766
    %832 = vmatprep.subr.bf16.mxu0 %v769
    %833 = vmatpush1.bf16.msra.mxu0 %v768
    %834 = vmatprep.subr.bf16.mxu0 %v771
    %835 = vmatpush1.bf16.msra.mxu0 %v770
    %836 = vmatprep.subr.bf16.mxu0 %v773
    %837 = vmatpush1.bf16.msra.mxu0 %v772
    %838 = vmatprep.subr.bf16.mxu0 %v775
    %839 = vmatpush1.bf16.msra.mxu0 %v774
    %840 = vmatprep.subr.bf16.mxu0 %v777
    %841 = vmatpush1.bf16.msra.mxu0 %v776
    %842 = vmatprep.subr.bf16.mxu0 %v779
    %843 = vmatpush1.bf16.msra.mxu0 %v778
    %844 = vmatprep.subr.bf16.mxu0 %v781
    %845 = vmatpush1.bf16.msra.mxu0 %v780
    %846 = vmatprep.subr.bf16.mxu0 %v783
    %847 = vmatpush1.bf16.msra.mxu0 %v782
    %848 = vmatprep.subr.bf16.mxu0 %v785
    %849 = vmatpush1.bf16.msra.mxu0 %v784
    %850 = vmatprep.mubr.bf16.mxu0 %v486
    %851 = vmatmul.mubr.bf16.gmra.mrb[0].mxu0 %v485
    %v852 = vpop.f32.mrb[0].mxu0
    %v853 = vadd.f32 %v652, %v852
    %v854 = vpop.f32.mrb[0].mxu0
    %v855 = vadd.f32 %v654, %v854
    %v856 = vpop.f32.mrb[0].mxu0
    %v857 = vpop.f32.mrb[0].mxu0
    %858 = vdwg.mxu0
    %s859 = scalar_lea.vmem %s4, 2
    %v860 = vld [vmem:[%s859] ss:$8 sm:$0x3]
    %v862 = vlaneseq
    %v863 = vshrl.u32 %v862, 7
    %v864 = vsub.s32 0, %v863
    %v865 = vrot.slane %v860, %v864
    %v866 = vlaneseq
    %v867 = vshrl.u32 %v866, 7
    %v868 = vsub.s32 1, %v867
    %v869 = vrot.slane %v860, %v868
    %v872 = vadd.f32 %v853, %v865
    %v873 = vadd.f32 %v855, %v869
    %vm874 = vcmp.gt.f32.partialorder %v872, 0.0
    %vm875 = vcmp.gt.f32.partialorder %v873, 0.0
    %v876 = vmin.f32 %v872, 0.0
    %v877 = vmin.f32 %v873, 0.0
    %v878 = vmul.f32 %v876, 1.442695
    %v879 = vpow.pop %v878
    %v880 = vmul.f32 %v877, 1.442695
    %v881 = vpow.pop %v880
    %v882 = vsub.f32 %v879, 1.0
    %v883 = vsub.f32 %v881, 1.0
    %v884 = vsel %vm874, %v872, %v882
    %v885 = vsel %vm875, %v873, %v883
    %v886 = vpack.c.bf16 %v884, %v884
    %v887 = vpack.c.bf16 %v885, %v885
    %s888 = scalar_lea.vmem [#allocation4], 512
    %v889 = vld [vmem:[%s888] sm:$0xff]
    %v890 = vld [vmem:[%s888 + $0x8] sm:$0xff]
    %v891 = vld [vmem:[%s888 + $0x10] sm:$0xff]
    %v892 = vld [vmem:[%s888 + $0x18] sm:$0xff]
    %v893 = vld [vmem:[%s888 + $0x20] sm:$0xff]
    %v894 = vld [vmem:[%s888 + $0x28] sm:$0xff]
    %v895 = vld [vmem:[%s888 + $0x30] sm:$0xff]
    %v896 = vld [vmem:[%s888 + $0x38] sm:$0xff]
    %v897 = vld [vmem:[%s888 + $0x40] sm:$0xff]
    %v898 = vld [vmem:[%s888 + $0x48] sm:$0xff]
    %v899 = vld [vmem:[%s888 + $0x50] sm:$0xff]
    %v900 = vld [vmem:[%s888 + $0x58] sm:$0xff]
    %v901 = vld [vmem:[%s888 + $0x60] sm:$0xff]
    %v902 = vld [vmem:[%s888 + $0x68] sm:$0xff]
    %v903 = vld [vmem:[%s888 + $0x70] sm:$0xff]
    %v904 = vld [vmem:[%s888 + $0x78] sm:$0xff]
    %v905 = vld [vmem:[%s888 + $0x80] sm:$0xff]
    %v906 = vld [vmem:[%s888 + $0x88] sm:$0xff]
    %v907 = vld [vmem:[%s888 + $0x90] sm:$0xff]
    %v908 = vld [vmem:[%s888 + $0x98] sm:$0xff]
    %v909 = vld [vmem:[%s888 + $0xa0] sm:$0xff]
    %v910 = vld [vmem:[%s888 + $0xa8] sm:$0xff]
    %v911 = vld [vmem:[%s888 + $0xb0] sm:$0xff]
    %v912 = vld [vmem:[%s888 + $0xb8] sm:$0xff]
    %v913 = vld [vmem:[%s888 + $0xc0] sm:$0xff]
    %v914 = vld [vmem:[%s888 + $0xc8] sm:$0xff]
    %v915 = vld [vmem:[%s888 + $0xd0] sm:$0xff]
    %v916 = vld [vmem:[%s888 + $0xd8] sm:$0xff]
    %v917 = vld [vmem:[%s888 + $0xe0] sm:$0xff]
    %v918 = vld [vmem:[%s888 + $0xe8] sm:$0xff]
    %v919 = vld [vmem:[%s888 + $0xf0] sm:$0xff]
    %v920 = vld [vmem:[%s888 + $0xf8] sm:$0xff]
    %s921 = scalar_lea.vmem %s4, 3
    %v922 = vld [vmem:[%s921] ss:$8 sm:$0x3]
    %v924 = vlaneseq
    %v925 = vshrl.u32 %v924, 7
    %v926 = vsub.s32 0, %v925
    %v927 = vrot.slane %v922, %v926
    %v928 = vlaneseq
    %v929 = vshrl.u32 %v928, 7
    %v930 = vsub.s32 1, %v929
    %v931 = vrot.slane %v922, %v930
    %v966 = vunpack.c.l.b16 %v889
    %v967 = vunpack.c.h.b16 %v889
    %v968 = vunpack.c.l.b16 %v890
    %v969 = vunpack.c.h.b16 %v890
    %v970 = vunpack.c.l.b16 %v891
    %v971 = vunpack.c.h.b16 %v891
    %v972 = vunpack.c.l.b16 %v892
    %v973 = vunpack.c.h.b16 %v892
    %v974 = vunpack.c.l.b16 %v893
    %v975 = vunpack.c.h.b16 %v893
    %v976 = vunpack.c.l.b16 %v894
    %v977 = vunpack.c.h.b16 %v894
    %v978 = vunpack.c.l.b16 %v895
    %v979 = vunpack.c.h.b16 %v895
    %v980 = vunpack.c.l.b16 %v896
    %v981 = vunpack.c.h.b16 %v896
    %v982 = vunpack.c.l.b16 %v897
    %v983 = vunpack.c.h.b16 %v897
    %v984 = vunpack.c.l.b16 %v898
    %v985 = vunpack.c.h.b16 %v898
    %v986 = vunpack.c.l.b16 %v899
    %v987 = vunpack.c.h.b16 %v899
    %v988 = vunpack.c.l.b16 %v900
    %v989 = vunpack.c.h.b16 %v900
    %v990 = vunpack.c.l.b16 %v901
    %v991 = vunpack.c.h.b16 %v901
    %v992 = vunpack.c.l.b16 %v902
    %v993 = vunpack.c.h.b16 %v902
    %v994 = vunpack.c.l.b16 %v903
    %v995 = vunpack.c.h.b16 %v903
    %v996 = vunpack.c.l.b16 %v904
    %v997 = vunpack.c.h.b16 %v904
    %v998 = vunpack.c.l.b16 %v905
    %v999 = vunpack.c.h.b16 %v905
    %v1000 = vunpack.c.l.b16 %v906
    %v1001 = vunpack.c.h.b16 %v906
    %v1002 = vunpack.c.l.b16 %v907
    %v1003 = vunpack.c.h.b16 %v907
    %v1004 = vunpack.c.l.b16 %v908
    %v1005 = vunpack.c.h.b16 %v908
    %v1006 = vunpack.c.l.b16 %v909
    %v1007 = vunpack.c.h.b16 %v909
    %v1008 = vunpack.c.l.b16 %v910
    %v1009 = vunpack.c.h.b16 %v910
    %v1010 = vunpack.c.l.b16 %v911
    %v1011 = vunpack.c.h.b16 %v911
    %v1012 = vunpack.c.l.b16 %v912
    %v1013 = vunpack.c.h.b16 %v912
    %v1014 = vunpack.c.l.b16 %v913
    %v1015 = vunpack.c.h.b16 %v913
    %v1016 = vunpack.c.l.b16 %v914
    %v1017 = vunpack.c.h.b16 %v914
    %v1018 = vunpack.c.l.b16 %v915
    %v1019 = vunpack.c.h.b16 %v915
    %v1020 = vunpack.c.l.b16 %v916
    %v1021 = vunpack.c.h.b16 %v916
    %v1022 = vunpack.c.l.b16 %v917
    %v1023 = vunpack.c.h.b16 %v917
    %v1024 = vunpack.c.l.b16 %v918
    %v1025 = vunpack.c.h.b16 %v918
    %v1026 = vunpack.c.l.b16 %v919
    %v1027 = vunpack.c.h.b16 %v919
    %v1028 = vunpack.c.l.b16 %v920
    %v1029 = vunpack.c.h.b16 %v920
    %v1030 = vpack.c.b16 %v968, %v966
    %v1031 = vpack.c.b16 %v969, %v967
    %v1032 = vpack.c.b16 %v972, %v970
    %v1033 = vpack.c.b16 %v973, %v971
    %v1034 = vpack.c.b16 %v976, %v974
    %v1035 = vpack.c.b16 %v977, %v975
    %v1036 = vpack.c.b16 %v980, %v978
    %v1037 = vpack.c.b16 %v981, %v979
    %v1038 = vpack.c.b16 %v984, %v982
    %v1039 = vpack.c.b16 %v985, %v983
    %v1040 = vpack.c.b16 %v988, %v986
    %v1041 = vpack.c.b16 %v989, %v987
    %v1042 = vpack.c.b16 %v992, %v990
    %v1043 = vpack.c.b16 %v993, %v991
    %v1044 = vpack.c.b16 %v996, %v994
    %v1045 = vpack.c.b16 %v997, %v995
    %v1046 = vpack.c.b16 %v1000, %v998
    %v1047 = vpack.c.b16 %v1001, %v999
    %v1048 = vpack.c.b16 %v1004, %v1002
    %v1049 = vpack.c.b16 %v1005, %v1003
    %v1050 = vpack.c.b16 %v1008, %v1006
    %v1051 = vpack.c.b16 %v1009, %v1007
    %v1052 = vpack.c.b16 %v1012, %v1010
    %v1053 = vpack.c.b16 %v1013, %v1011
    %v1054 = vpack.c.b16 %v1016, %v1014
    %v1055 = vpack.c.b16 %v1017, %v1015
    %v1056 = vpack.c.b16 %v1020, %v1018
    %v1057 = vpack.c.b16 %v1021, %v1019
    %v1058 = vpack.c.b16 %v1024, %v1022
    %v1059 = vpack.c.b16 %v1025, %v1023
    %v1060 = vpack.c.b16 %v1028, %v1026
    %v1061 = vpack.c.b16 %v1029, %v1027
    %1094 = vmatprep.subr.bf16.mxu0 %v1031
    %1095 = vmatpush1.bf16.msra.mxu0 %v1030
    %1096 = vmatprep.subr.bf16.mxu0 %v1033
    %1097 = vmatpush1.bf16.msra.mxu0 %v1032
    %1098 = vmatprep.subr.bf16.mxu0 %v1035
    %1099 = vmatpush1.bf16.msra.mxu0 %v1034
    %1100 = vmatprep.subr.bf16.mxu0 %v1037
    %1101 = vmatpush1.bf16.msra.mxu0 %v1036
    %1102 = vmatprep.subr.bf16.mxu0 %v1039
    %1103 = vmatpush1.bf16.msra.mxu0 %v1038
    %1104 = vmatprep.subr.bf16.mxu0 %v1041
    %1105 = vmatpush1.bf16.msra.mxu0 %v1040
    %1106 = vmatprep.subr.bf16.mxu0 %v1043
    %1107 = vmatpush1.bf16.msra.mxu0 %v1042
    %1108 = vmatprep.subr.bf16.mxu0 %v1045
    %1109 = vmatpush1.bf16.msra.mxu0 %v1044
    %1110 = vmatprep.subr.bf16.mxu0 %v1047
    %1111 = vmatpush1.bf16.msra.mxu0 %v1046
    %1112 = vmatprep.subr.bf16.mxu0 %v1049
    %1113 = vmatpush1.bf16.msra.mxu0 %v1048
    %1114 = vmatprep.subr.bf16.mxu0 %v1051
    %1115 = vmatpush1.bf16.msra.mxu0 %v1050
    %1116 = vmatprep.subr.bf16.mxu0 %v1053
    %1117 = vmatpush1.bf16.msra.mxu0 %v1052
    %1118 = vmatprep.subr.bf16.mxu0 %v1055
    %1119 = vmatpush1.bf16.msra.mxu0 %v1054
    %1120 = vmatprep.subr.bf16.mxu0 %v1057
    %1121 = vmatpush1.bf16.msra.mxu0 %v1056
    %1122 = vmatprep.subr.bf16.mxu0 %v1059
    %1123 = vmatpush1.bf16.msra.mxu0 %v1058
    %1124 = vmatprep.subr.bf16.mxu0 %v1061
    %1125 = vmatpush1.bf16.msra.mxu0 %v1060
    %1126 = vmatprep.mubr.bf16.mxu0 %v887
    %1127 = vmatmul.mubr.bf16.gmra.mrb[0].mxu0 %v886
    %v1128 = vpop.f32.mrb[0].mxu0
    %v1129 = vadd.f32 %v927, %v1128
    %v1130 = vpop.f32.mrb[0].mxu0
    %v1131 = vadd.f32 %v931, %v1130
    %v1132 = vpop.f32.mrb[0].mxu0
    %v1133 = vpop.f32.mrb[0].mxu0
    %1134 = vdwg.mxu0
    %vm1135 = vcmp.gt.f32.partialorder %v1129, 0.0
    %vm1136 = vcmp.gt.f32.partialorder %v1131, 0.0
    %v1137 = vmin.f32 %v1129, 0.0
    %v1138 = vmin.f32 %v1131, 0.0
    %v1139 = vmul.f32 %v1137, 1.442695
    %v1140 = vpow.pop %v1139
    %v1141 = vmul.f32 %v1138, 1.442695
    %v1142 = vpow.pop %v1141
    %v1143 = vsub.f32 %v1140, 1.0
    %v1144 = vsub.f32 %v1142, 1.0
    %v1145 = vsel %vm1135, %v1129, %v1143
    %v1146 = vsel %vm1136, %v1131, %v1144
    %v1147 = vpack.c.bf16 %v1145, %v1145
    %v1148 = vpack.c.bf16 %v1146, %v1146
    %s1149 = scalar_lea.vmem [#allocation4], 768
    %v1150 = vld [vmem:[%s1149] sm:$0xff]
    %v1151 = vld [vmem:[%s1149 + $0x8] sm:$0xff]
    %v1152 = vld [vmem:[%s1149 + $0x10] sm:$0xff]
    %v1153 = vld [vmem:[%s1149 + $0x18] sm:$0xff]
    %v1154 = vld [vmem:[%s1149 + $0x20] sm:$0xff]
    %v1155 = vld [vmem:[%s1149 + $0x28] sm:$0xff]
    %v1156 = vld [vmem:[%s1149 + $0x30] sm:$0xff]
    %v1157 = vld [vmem:[%s1149 + $0x38] sm:$0xff]
    %v1158 = vld [vmem:[%s1149 + $0x40] sm:$0xff]
    %v1159 = vld [vmem:[%s1149 + $0x48] sm:$0xff]
    %v1160 = vld [vmem:[%s1149 + $0x50] sm:$0xff]
    %v1161 = vld [vmem:[%s1149 + $0x58] sm:$0xff]
    %v1162 = vld [vmem:[%s1149 + $0x60] sm:$0xff]
    %v1163 = vld [vmem:[%s1149 + $0x68] sm:$0xff]
    %v1164 = vld [vmem:[%s1149 + $0x70] sm:$0xff]
    %v1165 = vld [vmem:[%s1149 + $0x78] sm:$0xff]
    %v1166 = vld [vmem:[%s1149 + $0x80] sm:$0xff]
    %v1167 = vld [vmem:[%s1149 + $0x88] sm:$0xff]
    %v1168 = vld [vmem:[%s1149 + $0x90] sm:$0xff]
    %v1169 = vld [vmem:[%s1149 + $0x98] sm:$0xff]
    %v1170 = vld [vmem:[%s1149 + $0xa0] sm:$0xff]
    %v1171 = vld [vmem:[%s1149 + $0xa8] sm:$0xff]
    %v1172 = vld [vmem:[%s1149 + $0xb0] sm:$0xff]
    %v1173 = vld [vmem:[%s1149 + $0xb8] sm:$0xff]
    %v1174 = vld [vmem:[%s1149 + $0xc0] sm:$0xff]
    %v1175 = vld [vmem:[%s1149 + $0xc8] sm:$0xff]
    %v1176 = vld [vmem:[%s1149 + $0xd0] sm:$0xff]
    %v1177 = vld [vmem:[%s1149 + $0xd8] sm:$0xff]
    %v1178 = vld [vmem:[%s1149 + $0xe0] sm:$0xff]
    %v1179 = vld [vmem:[%s1149 + $0xe8] sm:$0xff]
    %v1180 = vld [vmem:[%s1149 + $0xf0] sm:$0xff]
    %v1181 = vld [vmem:[%s1149 + $0xf8] sm:$0xff]
    %s1182 = scalar_lea.vmem %s4, 4
    %v1183 = vld [vmem:[%s1182] ss:$8 sm:$0x3]
    %v1185 = vlaneseq
    %v1186 = vshrl.u32 %v1185, 7
    %v1187 = vsub.s32 0, %v1186
    %v1188 = vrot.slane %v1183, %v1187
    %v1189 = vlaneseq
    %v1190 = vshrl.u32 %v1189, 7
    %v1191 = vsub.s32 1, %v1190
    %v1192 = vrot.slane %v1183, %v1191
    %v1227 = vunpack.c.l.b16 %v1150
    %v1228 = vunpack.c.h.b16 %v1150
    %v1229 = vunpack.c.l.b16 %v1151
    %v1230 = vunpack.c.h.b16 %v1151
    %v1231 = vunpack.c.l.b16 %v1152
    %v1232 = vunpack.c.h.b16 %v1152
    %v1233 = vunpack.c.l.b16 %v1153
    %v1234 = vunpack.c.h.b16 %v1153
    %v1235 = vunpack.c.l.b16 %v1154
    %v1236 = vunpack.c.h.b16 %v1154
    %v1237 = vunpack.c.l.b16 %v1155
    %v1238 = vunpack.c.h.b16 %v1155
    %v1239 = vunpack.c.l.b16 %v1156
    %v1240 = vunpack.c.h.b16 %v1156
    %v1241 = vunpack.c.l.b16 %v1157
    %v1242 = vunpack.c.h.b16 %v1157
    %v1243 = vunpack.c.l.b16 %v1158
    %v1244 = vunpack.c.h.b16 %v1158
    %v1245 = vunpack.c.l.b16 %v1159
    %v1246 = vunpack.c.h.b16 %v1159
    %v1247 = vunpack.c.l.b16 %v1160
    %v1248 = vunpack.c.h.b16 %v1160
    %v1249 = vunpack.c.l.b16 %v1161
    %v1250 = vunpack.c.h.b16 %v1161
    %v1251 = vunpack.c.l.b16 %v1162
    %v1252 = vunpack.c.h.b16 %v1162
    %v1253 = vunpack.c.l.b16 %v1163
    %v1254 = vunpack.c.h.b16 %v1163
    %v1255 = vunpack.c.l.b16 %v1164
    %v1256 = vunpack.c.h.b16 %v1164
    %v1257 = vunpack.c.l.b16 %v1165
    %v1258 = vunpack.c.h.b16 %v1165
    %v1259 = vunpack.c.l.b16 %v1166
    %v1260 = vunpack.c.h.b16 %v1166
    %v1261 = vunpack.c.l.b16 %v1167
    %v1262 = vunpack.c.h.b16 %v1167
    %v1263 = vunpack.c.l.b16 %v1168
    %v1264 = vunpack.c.h.b16 %v1168
    %v1265 = vunpack.c.l.b16 %v1169
    %v1266 = vunpack.c.h.b16 %v1169
    %v1267 = vunpack.c.l.b16 %v1170
    %v1268 = vunpack.c.h.b16 %v1170
    %v1269 = vunpack.c.l.b16 %v1171
    %v1270 = vunpack.c.h.b16 %v1171
    %v1271 = vunpack.c.l.b16 %v1172
    %v1272 = vunpack.c.h.b16 %v1172
    %v1273 = vunpack.c.l.b16 %v1173
    %v1274 = vunpack.c.h.b16 %v1173
    %v1275 = vunpack.c.l.b16 %v1174
    %v1276 = vunpack.c.h.b16 %v1174
    %v1277 = vunpack.c.l.b16 %v1175
    %v1278 = vunpack.c.h.b16 %v1175
    %v1279 = vunpack.c.l.b16 %v1176
    %v1280 = vunpack.c.h.b16 %v1176
    %v1281 = vunpack.c.l.b16 %v1177
    %v1282 = vunpack.c.h.b16 %v1177
    %v1283 = vunpack.c.l.b16 %v1178
    %v1284 = vunpack.c.h.b16 %v1178
    %v1285 = vunpack.c.l.b16 %v1179
    %v1286 = vunpack.c.h.b16 %v1179
    %v1287 = vunpack.c.l.b16 %v1180
    %v1288 = vunpack.c.h.b16 %v1180
    %v1289 = vunpack.c.l.b16 %v1181
    %v1290 = vunpack.c.h.b16 %v1181
    %v1291 = vpack.c.b16 %v1229, %v1227
    %v1292 = vpack.c.b16 %v1230, %v1228
    %v1293 = vpack.c.b16 %v1233, %v1231
    %v1294 = vpack.c.b16 %v1234, %v1232
    %v1295 = vpack.c.b16 %v1237, %v1235
    %v1296 = vpack.c.b16 %v1238, %v1236
    %v1297 = vpack.c.b16 %v1241, %v1239
    %v1298 = vpack.c.b16 %v1242, %v1240
    %v1299 = vpack.c.b16 %v1245, %v1243
    %v1300 = vpack.c.b16 %v1246, %v1244
    %v1301 = vpack.c.b16 %v1249, %v1247
    %v1302 = vpack.c.b16 %v1250, %v1248
    %v1303 = vpack.c.b16 %v1253, %v1251
    %v1304 = vpack.c.b16 %v1254, %v1252
    %v1305 = vpack.c.b16 %v1257, %v1255
    %v1306 = vpack.c.b16 %v1258, %v1256
    %v1307 = vpack.c.b16 %v1261, %v1259
    %v1308 = vpack.c.b16 %v1262, %v1260
    %v1309 = vpack.c.b16 %v1265, %v1263
    %v1310 = vpack.c.b16 %v1266, %v1264
    %v1311 = vpack.c.b16 %v1269, %v1267
    %v1312 = vpack.c.b16 %v1270, %v1268
    %v1313 = vpack.c.b16 %v1273, %v1271
    %v1314 = vpack.c.b16 %v1274, %v1272
    %v1315 = vpack.c.b16 %v1277, %v1275
    %v1316 = vpack.c.b16 %v1278, %v1276
    %v1317 = vpack.c.b16 %v1281, %v1279
    %v1318 = vpack.c.b16 %v1282, %v1280
    %v1319 = vpack.c.b16 %v1285, %v1283
    %v1320 = vpack.c.b16 %v1286, %v1284
    %v1321 = vpack.c.b16 %v1289, %v1287
    %v1322 = vpack.c.b16 %v1290, %v1288
    %1355 = vmatprep.subr.bf16.mxu0 %v1292
    %1356 = vmatpush1.bf16.msra.mxu0 %v1291
    %1357 = vmatprep.subr.bf16.mxu0 %v1294
    %1358 = vmatpush1.bf16.msra.mxu0 %v1293
    %1359 = vmatprep.subr.bf16.mxu0 %v1296
    %1360 = vmatpush1.bf16.msra.mxu0 %v1295
    %1361 = vmatprep.subr.bf16.mxu0 %v1298
    %1362 = vmatpush1.bf16.msra.mxu0 %v1297
    %1363 = vmatprep.subr.bf16.mxu0 %v1300
    %1364 = vmatpush1.bf16.msra.mxu0 %v1299
    %1365 = vmatprep.subr.bf16.mxu0 %v1302
    %1366 = vmatpush1.bf16.msra.mxu0 %v1301
    %1367 = vmatprep.subr.bf16.mxu0 %v1304
    %1368 = vmatpush1.bf16.msra.mxu0 %v1303
    %1369 = vmatprep.subr.bf16.mxu0 %v1306
    %1370 = vmatpush1.bf16.msra.mxu0 %v1305
    %1371 = vmatprep.subr.bf16.mxu0 %v1308
    %1372 = vmatpush1.bf16.msra.mxu0 %v1307
    %1373 = vmatprep.subr.bf16.mxu0 %v1310
    %1374 = vmatpush1.bf16.msra.mxu0 %v1309
    %1375 = vmatprep.subr.bf16.mxu0 %v1312
    %1376 = vmatpush1.bf16.msra.mxu0 %v1311
    %1377 = vmatprep.subr.bf16.mxu0 %v1314
    %1378 = vmatpush1.bf16.msra.mxu0 %v1313
    %1379 = vmatprep.subr.bf16.mxu0 %v1316
    %1380 = vmatpush1.bf16.msra.mxu0 %v1315
    %1381 = vmatprep.subr.bf16.mxu0 %v1318
    %1382 = vmatpush1.bf16.msra.mxu0 %v1317
    %1383 = vmatprep.subr.bf16.mxu0 %v1320
    %1384 = vmatpush1.bf16.msra.mxu0 %v1319
    %1385 = vmatprep.subr.bf16.mxu0 %v1322
    %1386 = vmatpush1.bf16.msra.mxu0 %v1321
    %1387 = vmatprep.mubr.bf16.mxu0 %v1148
    %1388 = vmatmul.mubr.bf16.gmra.mrb[0].mxu0 %v1147
    %v1389 = vpop.f32.mrb[0].mxu0
    %v1390 = vadd.f32 %v1188, %v1389
    %v1391 = vpop.f32.mrb[0].mxu0
    %v1392 = vadd.f32 %v1192, %v1391
    %v1393 = vpop.f32.mrb[0].mxu0
    %v1394 = vpop.f32.mrb[0].mxu0
    %1395 = vdwg.mxu0
    %vm1396 = vcmp.gt.f32.partialorder %v1390, 0.0
    %vm1397 = vcmp.gt.f32.partialorder %v1392, 0.0
    %v1398 = vmin.f32 %v1390, 0.0
    %v1399 = vmin.f32 %v1392, 0.0
    %v1400 = vmul.f32 %v1398, 1.442695
    %v1401 = vpow.pop %v1400
    %v1402 = vmul.f32 %v1399, 1.442695
    %v1403 = vpow.pop %v1402
    %v1404 = vsub.f32 %v1401, 1.0
    %v1405 = vsub.f32 %v1403, 1.0
    %v1406 = vsel %vm1396, %v1390, %v1404
    %v1407 = vsel %vm1397, %v1392, %v1405
    %s1408 = scalar_lea.vmem [#allocation2], 256
    %v1409 = vld [vmem:[%s1408] sm:$0xff]
    %v1410 = vld [vmem:[%s1408 + $0x8] sm:$0xff]
    %v1411 = vld [vmem:[%s1408 + $0x10] sm:$0xff]
    %v1412 = vld [vmem:[%s1408 + $0x18] sm:$0xff]
    %v1413 = vld [vmem:[%s1408 + $0x20] sm:$0xff]
    %v1414 = vld [vmem:[%s1408 + $0x28] sm:$0xff]
    %v1415 = vld [vmem:[%s1408 + $0x30] sm:$0xff]
    %v1416 = vld [vmem:[%s1408 + $0x38] sm:$0xff]
    %v1417 = vld [vmem:[%s1408 + $0x40] sm:$0xff]
    %v1418 = vld [vmem:[%s1408 + $0x48] sm:$0xff]
    %v1419 = vld [vmem:[%s1408 + $0x50] sm:$0xff]
    %v1420 = vld [vmem:[%s1408 + $0x58] sm:$0xff]
    %v1421 = vld [vmem:[%s1408 + $0x60] sm:$0xff]
    %v1422 = vld [vmem:[%s1408 + $0x68] sm:$0xff]
    %v1423 = vld [vmem:[%s1408 + $0x70] sm:$0xff]
    %v1424 = vld [vmem:[%s1408 + $0x78] sm:$0xff]
    %s1425 = scalar_lea.vmem %s4, 5
    %v1426 = vld [vmem:[%s1425] ss:$8 sm:$0x3]
    %v1428 = vlaneseq
    %v1429 = vshrl.u32 %v1428, 7
    %v1430 = vsub.s32 0, %v1429
    %v1431 = vrot.slane %v1426, %v1430
    %v1432 = vlaneseq
    %v1433 = vshrl.u32 %v1432, 7
    %v1434 = vsub.s32 1, %v1433
    %v1435 = vrot.slane %v1426, %v1434
    %v1454 = vunpack.c.l.b16 %v1409
    %v1455 = vunpack.c.h.b16 %v1409
    %v1456 = vunpack.c.l.b16 %v1410
    %v1457 = vunpack.c.h.b16 %v1410
    %v1458 = vunpack.c.l.b16 %v1411
    %v1459 = vunpack.c.h.b16 %v1411
    %v1460 = vunpack.c.l.b16 %v1412
    %v1461 = vunpack.c.h.b16 %v1412
    %v1462 = vunpack.c.l.b16 %v1413
    %v1463 = vunpack.c.h.b16 %v1413
    %v1464 = vunpack.c.l.b16 %v1414
    %v1465 = vunpack.c.h.b16 %v1414
    %v1466 = vunpack.c.l.b16 %v1415
    %v1467 = vunpack.c.h.b16 %v1415
    %v1468 = vunpack.c.l.b16 %v1416
    %v1469 = vunpack.c.h.b16 %v1416
    %v1470 = vunpack.c.l.b16 %v1417
    %v1471 = vunpack.c.h.b16 %v1417
    %v1472 = vunpack.c.l.b16 %v1418
    %v1473 = vunpack.c.h.b16 %v1418
    %v1474 = vunpack.c.l.b16 %v1419
    %v1475 = vunpack.c.h.b16 %v1419
    %v1476 = vunpack.c.l.b16 %v1420
    %v1477 = vunpack.c.h.b16 %v1420
    %v1478 = vunpack.c.l.b16 %v1421
    %v1479 = vunpack.c.h.b16 %v1421
    %v1480 = vunpack.c.l.b16 %v1422
    %v1481 = vunpack.c.h.b16 %v1422
    %v1482 = vunpack.c.l.b16 %v1423
    %v1483 = vunpack.c.h.b16 %v1423
    %v1484 = vunpack.c.l.b16 %v1424
    %v1485 = vunpack.c.h.b16 %v1424
    %v1486 = vpack.c.b16 %v1456, %v1454
    %v1487 = vpack.c.b16 %v1457, %v1455
    %v1488 = vpack.c.b16 %v1460, %v1458
    %v1489 = vpack.c.b16 %v1461, %v1459
    %v1490 = vpack.c.b16 %v1464, %v1462
    %v1491 = vpack.c.b16 %v1465, %v1463
    %v1492 = vpack.c.b16 %v1468, %v1466
    %v1493 = vpack.c.b16 %v1469, %v1467
    %v1494 = vpack.c.b16 %v1472, %v1470
    %v1495 = vpack.c.b16 %v1473, %v1471
    %v1496 = vpack.c.b16 %v1476, %v1474
    %v1497 = vpack.c.b16 %v1477, %v1475
    %v1498 = vpack.c.b16 %v1480, %v1478
    %v1499 = vpack.c.b16 %v1481, %v1479
    %v1500 = vpack.c.b16 %v1484, %v1482
    %v1501 = vpack.c.b16 %v1485, %v1483
    %1518 = vmatprep.subr.bf16.mxu0 %v1487
    %1519 = vmatpush1.bf16.msra.mxu0 %v1486
    %1520 = vmatprep.subr.bf16.mxu0 %v1489
    %1521 = vmatpush1.bf16.msra.mxu0 %v1488
    %1522 = vmatprep.subr.bf16.mxu0 %v1491
    %1523 = vmatpush1.bf16.msra.mxu0 %v1490
    %1524 = vmatprep.subr.bf16.mxu0 %v1493
    %1525 = vmatpush1.bf16.msra.mxu0 %v1492
    %1526 = vmatprep.subr.bf16.mxu0 %v1495
    %1527 = vmatpush1.bf16.msra.mxu0 %v1494
    %1528 = vmatprep.subr.bf16.mxu0 %v1497
    %1529 = vmatpush1.bf16.msra.mxu0 %v1496
    %1530 = vmatprep.subr.bf16.mxu0 %v1499
    %1531 = vmatpush1.bf16.msra.mxu0 %v1498
    %1532 = vmatprep.subr.bf16.mxu0 %v1501
    %1533 = vmatpush1.bf16.msra.mxu0 %v1500
    %1534 = vmatprep.subr.bf16.mxu0 0
    %1535 = vmatpush1.bf16.msra.mxu0 0
    %1536 = vmatprep.subr.bf16.mxu0 0
    %1537 = vmatpush1.bf16.msra.mxu0 0
    %1538 = vmatprep.subr.bf16.mxu0 0
    %1539 = vmatpush1.bf16.msra.mxu0 0
    %1540 = vmatprep.subr.bf16.mxu0 0
    %1541 = vmatpush1.bf16.msra.mxu0 0
    %1542 = vmatprep.subr.bf16.mxu0 0
    %1543 = vmatpush1.bf16.msra.mxu0 0
    %1544 = vmatprep.subr.bf16.mxu0 0
    %1545 = vmatpush1.bf16.msra.mxu0 0
    %1546 = vmatprep.subr.bf16.mxu0 0
    %1547 = vmatpush1.bf16.msra.mxu0 0
    %1548 = vmatprep.subr.bf16.mxu0 0
    %1549 = vmatpush1.bf16.msra.mxu0 0
    %1550 = vmatprep.mubr.bf16.mxu0 0
    %1551 = vmatmul.mubr.bf16.gmra.mrb[0].mxu0 %v63
    %v1552 = vpop.f32.mrb[0].mxu0
    %v1553 = vadd.f32 %v1431, %v1552
    %v1554 = vpop.f32.mrb[0].mxu0
    %v1555 = vadd.f32 %v1435, %v1554
    %v1556 = vpop.f32.mrb[0].mxu0
    %v1557 = vpop.f32.mrb[0].mxu0
    %1558 = vdwg.mxu0
    %vm1559 = vcmp.gt.f32.partialorder %v1553, 0.0
    %vm1560 = vcmp.gt.f32.partialorder %v1555, 0.0
    %v1561 = vmin.f32 %v1553, 0.0
    %v1562 = vmin.f32 %v1555, 0.0
    %v1563 = vmul.f32 %v1561, 1.442695
    %v1564 = vpow.pop %v1563
    %v1565 = vmul.f32 %v1562, 1.442695
    %v1566 = vpow.pop %v1565
    %v1567 = vsub.f32 %v1564, 1.0
    %v1568 = vsub.f32 %v1566, 1.0
    %v1569 = vsel %vm1559, %v1553, %v1567
    %v1570 = vsel %vm1560, %v1555, %v1568
    %v1571 = vpack.c.bf16 %v1569, %v1569
    %v1572 = vpack.c.bf16 %v1570, %v1570
    %s1573 = scalar_lea.vmem [#allocation4], 1024
    %v1574 = vld [vmem:[%s1573] sm:$0xff]
    %v1575 = vld [vmem:[%s1573 + $0x8] sm:$0xff]
    %v1576 = vld [vmem:[%s1573 + $0x10] sm:$0xff]
    %v1577 = vld [vmem:[%s1573 + $0x18] sm:$0xff]
    %v1578 = vld [vmem:[%s1573 + $0x20] sm:$0xff]
    %v1579 = vld [vmem:[%s1573 + $0x28] sm:$0xff]
    %v1580 = vld [vmem:[%s1573 + $0x30] sm:$0xff]
    %v1581 = vld [vmem:[%s1573 + $0x38] sm:$0xff]
    %v1582 = vld [vmem:[%s1573 + $0x40] sm:$0xff]
    %v1583 = vld [vmem:[%s1573 + $0x48] sm:$0xff]
    %v1584 = vld [vmem:[%s1573 + $0x50] sm:$0xff]
    %v1585 = vld [vmem:[%s1573 + $0x58] sm:$0xff]
    %v1586 = vld [vmem:[%s1573 + $0x60] sm:$0xff]
    %v1587 = vld [vmem:[%s1573 + $0x68] sm:$0xff]
    %v1588 = vld [vmem:[%s1573 + $0x70] sm:$0xff]
    %v1589 = vld [vmem:[%s1573 + $0x78] sm:$0xff]
    %v1590 = vld [vmem:[%s1573 + $0x80] sm:$0xff]
    %v1591 = vld [vmem:[%s1573 + $0x88] sm:$0xff]
    %v1592 = vld [vmem:[%s1573 + $0x90] sm:$0xff]
    %v1593 = vld [vmem:[%s1573 + $0x98] sm:$0xff]
    %v1594 = vld [vmem:[%s1573 + $0xa0] sm:$0xff]
    %v1595 = vld [vmem:[%s1573 + $0xa8] sm:$0xff]
    %v1596 = vld [vmem:[%s1573 + $0xb0] sm:$0xff]
    %v1597 = vld [vmem:[%s1573 + $0xb8] sm:$0xff]
    %v1598 = vld [vmem:[%s1573 + $0xc0] sm:$0xff]
    %v1599 = vld [vmem:[%s1573 + $0xc8] sm:$0xff]
    %v1600 = vld [vmem:[%s1573 + $0xd0] sm:$0xff]
    %v1601 = vld [vmem:[%s1573 + $0xd8] sm:$0xff]
    %v1602 = vld [vmem:[%s1573 + $0xe0] sm:$0xff]
    %v1603 = vld [vmem:[%s1573 + $0xe8] sm:$0xff]
    %v1604 = vld [vmem:[%s1573 + $0xf0] sm:$0xff]
    %v1605 = vld [vmem:[%s1573 + $0xf8] sm:$0xff]
    %s1606 = scalar_lea.vmem %s4, 6
    %v1607 = vld [vmem:[%s1606] ss:$8 sm:$0x3]
    %v1609 = vlaneseq
    %v1610 = vshrl.u32 %v1609, 7
    %v1611 = vsub.s32 0, %v1610
    %v1612 = vrot.slane %v1607, %v1611
    %v1613 = vlaneseq
    %v1614 = vshrl.u32 %v1613, 7
    %v1615 = vsub.s32 1, %v1614
    %v1616 = vrot.slane %v1607, %v1615
    %v1651 = vunpack.c.l.b16 %v1574
    %v1652 = vunpack.c.h.b16 %v1574
    %v1653 = vunpack.c.l.b16 %v1575
    %v1654 = vunpack.c.h.b16 %v1575
    %v1655 = vunpack.c.l.b16 %v1576
    %v1656 = vunpack.c.h.b16 %v1576
    %v1657 = vunpack.c.l.b16 %v1577
    %v1658 = vunpack.c.h.b16 %v1577
    %v1659 = vunpack.c.l.b16 %v1578
    %v1660 = vunpack.c.h.b16 %v1578
    %v1661 = vunpack.c.l.b16 %v1579
    %v1662 = vunpack.c.h.b16 %v1579
    %v1663 = vunpack.c.l.b16 %v1580
    %v1664 = vunpack.c.h.b16 %v1580
    %v1665 = vunpack.c.l.b16 %v1581
    %v1666 = vunpack.c.h.b16 %v1581
    %v1667 = vunpack.c.l.b16 %v1582
    %v1668 = vunpack.c.h.b16 %v1582
    %v1669 = vunpack.c.l.b16 %v1583
    %v1670 = vunpack.c.h.b16 %v1583
    %v1671 = vunpack.c.l.b16 %v1584
    %v1672 = vunpack.c.h.b16 %v1584
    %v1673 = vunpack.c.l.b16 %v1585
    %v1674 = vunpack.c.h.b16 %v1585
    %v1675 = vunpack.c.l.b16 %v1586
    %v1676 = vunpack.c.h.b16 %v1586
    %v1677 = vunpack.c.l.b16 %v1587
    %v1678 = vunpack.c.h.b16 %v1587
    %v1679 = vunpack.c.l.b16 %v1588
    %v1680 = vunpack.c.h.b16 %v1588
    %v1681 = vunpack.c.l.b16 %v1589
    %v1682 = vunpack.c.h.b16 %v1589
    %v1683 = vunpack.c.l.b16 %v1590
    %v1684 = vunpack.c.h.b16 %v1590
    %v1685 = vunpack.c.l.b16 %v1591
    %v1686 = vunpack.c.h.b16 %v1591
    %v1687 = vunpack.c.l.b16 %v1592
    %v1688 = vunpack.c.h.b16 %v1592
    %v1689 = vunpack.c.l.b16 %v1593
    %v1690 = vunpack.c.h.b16 %v1593
    %v1691 = vunpack.c.l.b16 %v1594
    %v1692 = vunpack.c.h.b16 %v1594
    %v1693 = vunpack.c.l.b16 %v1595
    %v1694 = vunpack.c.h.b16 %v1595
    %v1695 = vunpack.c.l.b16 %v1596
    %v1696 = vunpack.c.h.b16 %v1596
    %v1697 = vunpack.c.l.b16 %v1597
    %v1698 = vunpack.c.h.b16 %v1597
    %v1699 = vunpack.c.l.b16 %v1598
    %v1700 = vunpack.c.h.b16 %v1598
    %v1701 = vunpack.c.l.b16 %v1599
    %v1702 = vunpack.c.h.b16 %v1599
    %v1703 = vunpack.c.l.b16 %v1600
    %v1704 = vunpack.c.h.b16 %v1600
    %v1705 = vunpack.c.l.b16 %v1601
    %v1706 = vunpack.c.h.b16 %v1601
    %v1707 = vunpack.c.l.b16 %v1602
    %v1708 = vunpack.c.h.b16 %v1602
    %v1709 = vunpack.c.l.b16 %v1603
    %v1710 = vunpack.c.h.b16 %v1603
    %v1711 = vunpack.c.l.b16 %v1604
    %v1712 = vunpack.c.h.b16 %v1604
    %v1713 = vunpack.c.l.b16 %v1605
    %v1714 = vunpack.c.h.b16 %v1605
    %v1715 = vpack.c.b16 %v1653, %v1651
    %v1716 = vpack.c.b16 %v1654, %v1652
    %v1717 = vpack.c.b16 %v1657, %v1655
    %v1718 = vpack.c.b16 %v1658, %v1656
    %v1719 = vpack.c.b16 %v1661, %v1659
    %v1720 = vpack.c.b16 %v1662, %v1660
    %v1721 = vpack.c.b16 %v1665, %v1663
    %v1722 = vpack.c.b16 %v1666, %v1664
    %v1723 = vpack.c.b16 %v1669, %v1667
    %v1724 = vpack.c.b16 %v1670, %v1668
    %v1725 = vpack.c.b16 %v1673, %v1671
    %v1726 = vpack.c.b16 %v1674, %v1672
    %v1727 = vpack.c.b16 %v1677, %v1675
    %v1728 = vpack.c.b16 %v1678, %v1676
    %v1729 = vpack.c.b16 %v1681, %v1679
    %v1730 = vpack.c.b16 %v1682, %v1680
    %v1731 = vpack.c.b16 %v1685, %v1683
    %v1732 = vpack.c.b16 %v1686, %v1684
    %v1733 = vpack.c.b16 %v1689, %v1687
    %v1734 = vpack.c.b16 %v1690, %v1688
    %v1735 = vpack.c.b16 %v1693, %v1691
    %v1736 = vpack.c.b16 %v1694, %v1692
    %v1737 = vpack.c.b16 %v1697, %v1695
    %v1738 = vpack.c.b16 %v1698, %v1696
    %v1739 = vpack.c.b16 %v1701, %v1699
    %v1740 = vpack.c.b16 %v1702, %v1700
    %v1741 = vpack.c.b16 %v1705, %v1703
    %v1742 = vpack.c.b16 %v1706, %v1704
    %v1743 = vpack.c.b16 %v1709, %v1707
    %v1744 = vpack.c.b16 %v1710, %v1708
    %v1745 = vpack.c.b16 %v1713, %v1711
    %v1746 = vpack.c.b16 %v1714, %v1712
    %1779 = vmatprep.subr.bf16.mxu0 %v1716
    %1780 = vmatpush1.bf16.msra.mxu0 %v1715
    %1781 = vmatprep.subr.bf16.mxu0 %v1718
    %1782 = vmatpush1.bf16.msra.mxu0 %v1717
    %1783 = vmatprep.subr.bf16.mxu0 %v1720
    %1784 = vmatpush1.bf16.msra.mxu0 %v1719
    %1785 = vmatprep.subr.bf16.mxu0 %v1722
    %1786 = vmatpush1.bf16.msra.mxu0 %v1721
    %1787 = vmatprep.subr.bf16.mxu0 %v1724
    %1788 = vmatpush1.bf16.msra.mxu0 %v1723
    %1789 = vmatprep.subr.bf16.mxu0 %v1726
    %1790 = vmatpush1.bf16.msra.mxu0 %v1725
    %1791 = vmatprep.subr.bf16.mxu0 %v1728
    %1792 = vmatpush1.bf16.msra.mxu0 %v1727
    %1793 = vmatprep.subr.bf16.mxu0 %v1730
    %1794 = vmatpush1.bf16.msra.mxu0 %v1729
    %1795 = vmatprep.subr.bf16.mxu0 %v1732
    %1796 = vmatpush1.bf16.msra.mxu0 %v1731
    %1797 = vmatprep.subr.bf16.mxu0 %v1734
    %1798 = vmatpush1.bf16.msra.mxu0 %v1733
    %1799 = vmatprep.subr.bf16.mxu0 %v1736
    %1800 = vmatpush1.bf16.msra.mxu0 %v1735
    %1801 = vmatprep.subr.bf16.mxu0 %v1738
    %1802 = vmatpush1.bf16.msra.mxu0 %v1737
    %1803 = vmatprep.subr.bf16.mxu0 %v1740
    %1804 = vmatpush1.bf16.msra.mxu0 %v1739
    %1805 = vmatprep.subr.bf16.mxu0 %v1742
    %1806 = vmatpush1.bf16.msra.mxu0 %v1741
    %1807 = vmatprep.subr.bf16.mxu0 %v1744
    %1808 = vmatpush1.bf16.msra.mxu0 %v1743
    %1809 = vmatprep.subr.bf16.mxu0 %v1746
    %1810 = vmatpush1.bf16.msra.mxu0 %v1745
    %1811 = vmatprep.mubr.bf16.mxu0 %v1572
    %1812 = vmatmul.mubr.bf16.gmra.mrb[0].mxu0 %v1571
    %v1813 = vpop.f32.mrb[0].mxu0
    %v1814 = vadd.f32 %v1612, %v1813
    %v1815 = vpop.f32.mrb[0].mxu0
    %v1816 = vadd.f32 %v1616, %v1815
    %v1817 = vpop.f32.mrb[0].mxu0
    %v1818 = vpop.f32.mrb[0].mxu0
    %1819 = vdwg.mxu0
    %vm1820 = vcmp.gt.f32.partialorder %v1814, 0.0
    %vm1821 = vcmp.gt.f32.partialorder %v1816, 0.0
    %v1822 = vmin.f32 %v1814, 0.0
    %v1823 = vmin.f32 %v1816, 0.0
    %v1824 = vmul.f32 %v1822, 1.442695
    %v1825 = vpow.pop %v1824
    %v1826 = vmul.f32 %v1823, 1.442695
    %v1827 = vpow.pop %v1826
    %v1828 = vsub.f32 %v1825, 1.0
    %v1829 = vsub.f32 %v1827, 1.0
    %v1830 = vsel %vm1820, %v1814, %v1828
    %v1831 = vsel %vm1821, %v1816, %v1829
    %v1832 = vpack.c.bf16 %v1830, %v1830
    %v1833 = vpack.c.bf16 %v1831, %v1831
    %s1834 = scalar_lea.vmem [#allocation4], 1280
    %v1835 = vld [vmem:[%s1834] sm:$0xff]
    %v1836 = vld [vmem:[%s1834 + $0x8] sm:$0xff]
    %v1837 = vld [vmem:[%s1834 + $0x10] sm:$0xff]
    %v1838 = vld [vmem:[%s1834 + $0x18] sm:$0xff]
    %v1839 = vld [vmem:[%s1834 + $0x20] sm:$0xff]
    %v1840 = vld [vmem:[%s1834 + $0x28] sm:$0xff]
    %v1841 = vld [vmem:[%s1834 + $0x30] sm:$0xff]
    %v1842 = vld [vmem:[%s1834 + $0x38] sm:$0xff]
    %v1843 = vld [vmem:[%s1834 + $0x40] sm:$0xff]
    %v1844 = vld [vmem:[%s1834 + $0x48] sm:$0xff]
    %v1845 = vld [vmem:[%s1834 + $0x50] sm:$0xff]
    %v1846 = vld [vmem:[%s1834 + $0x58] sm:$0xff]
    %v1847 = vld [vmem:[%s1834 + $0x60] sm:$0xff]
    %v1848 = vld [vmem:[%s1834 + $0x68] sm:$0xff]
    %v1849 = vld [vmem:[%s1834 + $0x70] sm:$0xff]
    %v1850 = vld [vmem:[%s1834 + $0x78] sm:$0xff]
    %v1851 = vld [vmem:[%s1834 + $0x80] sm:$0xff]
    %v1852 = vld [vmem:[%s1834 + $0x88] sm:$0xff]
    %v1853 = vld [vmem:[%s1834 + $0x90] sm:$0xff]
    %v1854 = vld [vmem:[%s1834 + $0x98] sm:$0xff]
    %v1855 = vld [vmem:[%s1834 + $0xa0] sm:$0xff]
    %v1856 = vld [vmem:[%s1834 + $0xa8] sm:$0xff]
    %v1857 = vld [vmem:[%s1834 + $0xb0] sm:$0xff]
    %v1858 = vld [vmem:[%s1834 + $0xb8] sm:$0xff]
    %v1859 = vld [vmem:[%s1834 + $0xc0] sm:$0xff]
    %v1860 = vld [vmem:[%s1834 + $0xc8] sm:$0xff]
    %v1861 = vld [vmem:[%s1834 + $0xd0] sm:$0xff]
    %v1862 = vld [vmem:[%s1834 + $0xd8] sm:$0xff]
    %v1863 = vld [vmem:[%s1834 + $0xe0] sm:$0xff]
    %v1864 = vld [vmem:[%s1834 + $0xe8] sm:$0xff]
    %v1865 = vld [vmem:[%s1834 + $0xf0] sm:$0xff]
    %v1866 = vld [vmem:[%s1834 + $0xf8] sm:$0xff]
    %s1867 = scalar_lea.vmem %s4, 7
    %v1868 = vld [vmem:[%s1867] ss:$8 sm:$0x3]
    %v1870 = vlaneseq
    %v1871 = vshrl.u32 %v1870, 7
    %v1872 = vsub.s32 0, %v1871
    %v1873 = vrot.slane %v1868, %v1872
    %v1874 = vlaneseq
    %v1875 = vshrl.u32 %v1874, 7
    %v1876 = vsub.s32 1, %v1875
    %v1877 = vrot.slane %v1868, %v1876
    %v1912 = vunpack.c.l.b16 %v1835
    %v1913 = vunpack.c.h.b16 %v1835
    %v1914 = vunpack.c.l.b16 %v1836
    %v1915 = vunpack.c.h.b16 %v1836
    %v1916 = vunpack.c.l.b16 %v1837
    %v1917 = vunpack.c.h.b16 %v1837
    %v1918 = vunpack.c.l.b16 %v1838
    %v1919 = vunpack.c.h.b16 %v1838
    %v1920 = vunpack.c.l.b16 %v1839
    %v1921 = vunpack.c.h.b16 %v1839
    %v1922 = vunpack.c.l.b16 %v1840
    %v1923 = vunpack.c.h.b16 %v1840
    %v1924 = vunpack.c.l.b16 %v1841
    %v1925 = vunpack.c.h.b16 %v1841
    %v1926 = vunpack.c.l.b16 %v1842
    %v1927 = vunpack.c.h.b16 %v1842
    %v1928 = vunpack.c.l.b16 %v1843
    %v1929 = vunpack.c.h.b16 %v1843
    %v1930 = vunpack.c.l.b16 %v1844
    %v1931 = vunpack.c.h.b16 %v1844
    %v1932 = vunpack.c.l.b16 %v1845
    %v1933 = vunpack.c.h.b16 %v1845
    %v1934 = vunpack.c.l.b16 %v1846
    %v1935 = vunpack.c.h.b16 %v1846
    %v1936 = vunpack.c.l.b16 %v1847
    %v1937 = vunpack.c.h.b16 %v1847
    %v1938 = vunpack.c.l.b16 %v1848
    %v1939 = vunpack.c.h.b16 %v1848
    %v1940 = vunpack.c.l.b16 %v1849
    %v1941 = vunpack.c.h.b16 %v1849
    %v1942 = vunpack.c.l.b16 %v1850
    %v1943 = vunpack.c.h.b16 %v1850
    %v1944 = vunpack.c.l.b16 %v1851
    %v1945 = vunpack.c.h.b16 %v1851
    %v1946 = vunpack.c.l.b16 %v1852
    %v1947 = vunpack.c.h.b16 %v1852
    %v1948 = vunpack.c.l.b16 %v1853
    %v1949 = vunpack.c.h.b16 %v1853
    %v1950 = vunpack.c.l.b16 %v1854
    %v1951 = vunpack.c.h.b16 %v1854
    %v1952 = vunpack.c.l.b16 %v1855
    %v1953 = vunpack.c.h.b16 %v1855
    %v1954 = vunpack.c.l.b16 %v1856
    %v1955 = vunpack.c.h.b16 %v1856
    %v1956 = vunpack.c.l.b16 %v1857
    %v1957 = vunpack.c.h.b16 %v1857
    %v1958 = vunpack.c.l.b16 %v1858
    %v1959 = vunpack.c.h.b16 %v1858
    %v1960 = vunpack.c.l.b16 %v1859
    %v1961 = vunpack.c.h.b16 %v1859
    %v1962 = vunpack.c.l.b16 %v1860
    %v1963 = vunpack.c.h.b16 %v1860
    %v1964 = vunpack.c.l.b16 %v1861
    %v1965 = vunpack.c.h.b16 %v1861
    %v1966 = vunpack.c.l.b16 %v1862
    %v1967 = vunpack.c.h.b16 %v1862
    %v1968 = vunpack.c.l.b16 %v1863
    %v1969 = vunpack.c.h.b16 %v1863
    %v1970 = vunpack.c.l.b16 %v1864
    %v1971 = vunpack.c.h.b16 %v1864
    %v1972 = vunpack.c.l.b16 %v1865
    %v1973 = vunpack.c.h.b16 %v1865
    %v1974 = vunpack.c.l.b16 %v1866
    %v1975 = vunpack.c.h.b16 %v1866
    %v1976 = vpack.c.b16 %v1914, %v1912
    %v1977 = vpack.c.b16 %v1915, %v1913
    %v1978 = vpack.c.b16 %v1918, %v1916
    %v1979 = vpack.c.b16 %v1919, %v1917
    %v1980 = vpack.c.b16 %v1922, %v1920
    %v1981 = vpack.c.b16 %v1923, %v1921
    %v1982 = vpack.c.b16 %v1926, %v1924
    %v1983 = vpack.c.b16 %v1927, %v1925
    %v1984 = vpack.c.b16 %v1930, %v1928
    %v1985 = vpack.c.b16 %v1931, %v1929
    %v1986 = vpack.c.b16 %v1934, %v1932
    %v1987 = vpack.c.b16 %v1935, %v1933
    %v1988 = vpack.c.b16 %v1938, %v1936
    %v1989 = vpack.c.b16 %v1939, %v1937
    %v1990 = vpack.c.b16 %v1942, %v1940
    %v1991 = vpack.c.b16 %v1943, %v1941
    %v1992 = vpack.c.b16 %v1946, %v1944
    %v1993 = vpack.c.b16 %v1947, %v1945
    %v1994 = vpack.c.b16 %v1950, %v1948
    %v1995 = vpack.c.b16 %v1951, %v1949
    %v1996 = vpack.c.b16 %v1954, %v1952
    %v1997 = vpack.c.b16 %v1955, %v1953
    %v1998 = vpack.c.b16 %v1958, %v1956
    %v1999 = vpack.c.b16 %v1959, %v1957
    %v2000 = vpack.c.b16 %v1962, %v1960
    %v2001 = vpack.c.b16 %v1963, %v1961
    %v2002 = vpack.c.b16 %v1966, %v1964
    %v2003 = vpack.c.b16 %v1967, %v1965
    %v2004 = vpack.c.b16 %v1970, %v1968
    %v2005 = vpack.c.b16 %v1971, %v1969
    %v2006 = vpack.c.b16 %v1974, %v1972
    %v2007 = vpack.c.b16 %v1975, %v1973
    %2040 = vmatprep.subr.bf16.mxu0 %v1977
    %2041 = vmatpush1.bf16.msra.mxu0 %v1976
    %2042 = vmatprep.subr.bf16.mxu0 %v1979
    %2043 = vmatpush1.bf16.msra.mxu0 %v1978
    %2044 = vmatprep.subr.bf16.mxu0 %v1981
    %2045 = vmatpush1.bf16.msra.mxu0 %v1980
    %2046 = vmatprep.subr.bf16.mxu0 %v1983
    %2047 = vmatpush1.bf16.msra.mxu0 %v1982
    %2048 = vmatprep.subr.bf16.mxu0 %v1985
    %2049 = vmatpush1.bf16.msra.mxu0 %v1984
    %2050 = vmatprep.subr.bf16.mxu0 %v1987
    %2051 = vmatpush1.bf16.msra.mxu0 %v1986
    %2052 = vmatprep.subr.bf16.mxu0 %v1989
    %2053 = vmatpush1.bf16.msra.mxu0 %v1988
    %2054 = vmatprep.subr.bf16.mxu0 %v1991
    %2055 = vmatpush1.bf16.msra.mxu0 %v1990
    %2056 = vmatprep.subr.bf16.mxu0 %v1993
    %2057 = vmatpush1.bf16.msra.mxu0 %v1992
    %2058 = vmatprep.subr.bf16.mxu0 %v1995
    %2059 = vmatpush1.bf16.msra.mxu0 %v1994
    %2060 = vmatprep.subr.bf16.mxu0 %v1997
    %2061 = vmatpush1.bf16.msra.mxu0 %v1996
    %2062 = vmatprep.subr.bf16.mxu0 %v1999
    %2063 = vmatpush1.bf16.msra.mxu0 %v1998
    %2064 = vmatprep.subr.bf16.mxu0 %v2001
    %2065 = vmatpush1.bf16.msra.mxu0 %v2000
    %2066 = vmatprep.subr.bf16.mxu0 %v2003
    %2067 = vmatpush1.bf16.msra.mxu0 %v2002
    %2068 = vmatprep.subr.bf16.mxu0 %v2005
    %2069 = vmatpush1.bf16.msra.mxu0 %v2004
    %2070 = vmatprep.subr.bf16.mxu0 %v2007
    %2071 = vmatpush1.bf16.msra.mxu0 %v2006
    %2072 = vmatprep.mubr.bf16.mxu0 %v1833
    %2073 = vmatmul.mubr.bf16.gmra.mrb[0].mxu0 %v1832
    %v2074 = vpop.f32.mrb[0].mxu0
    %v2075 = vadd.f32 %v1873, %v2074
    %v2076 = vpop.f32.mrb[0].mxu0
    %v2077 = vadd.f32 %v1877, %v2076
    %v2078 = vpop.f32.mrb[0].mxu0
    %v2079 = vpop.f32.mrb[0].mxu0
    %2080 = vdwg.mxu0
    %vm2081 = vcmp.gt.f32.partialorder %v2075, 0.0
    %vm2082 = vcmp.gt.f32.partialorder %v2077, 0.0
    %v2083 = vmin.f32 %v2075, 0.0
    %v2084 = vmin.f32 %v2077, 0.0
    %v2085 = vmul.f32 %v2083, 1.442695
    %v2086 = vpow.pop %v2085
    %v2087 = vmul.f32 %v2084, 1.442695
    %v2088 = vpow.pop %v2087
    %v2089 = vsub.f32 %v2086, 1.0
    %v2090 = vsub.f32 %v2088, 1.0
    %v2091 = vsel %vm2081, %v2075, %v2089
    %v2092 = vsel %vm2082, %v2077, %v2090
    %v2093 = vpack.c.bf16 %v1406, %v1406
    %v2094 = vpack.c.bf16 %v1407, %v1407
    %v2095 = vld [vmem:[#allocation6] sm:$0xf]
    %v2096 = vld [vmem:[#allocation6 + $0x4] sm:$0xf]
    %v2097 = vld [vmem:[#allocation6 + $0x8] sm:$0xf]
    %v2098 = vld [vmem:[#allocation6 + $0xc] sm:$0xf]
    %v2099 = vld [vmem:[#allocation6 + $0x10] sm:$0xf]
    %v2100 = vld [vmem:[#allocation6 + $0x14] sm:$0xf]
    %v2101 = vld [vmem:[#allocation6 + $0x18] sm:$0xf]
    %v2102 = vld [vmem:[#allocation6 + $0x1c] sm:$0xf]
    %v2103 = vld [vmem:[#allocation6 + $0x20] sm:$0xf]
    %v2104 = vld [vmem:[#allocation6 + $0x24] sm:$0xf]
    %v2105 = vld [vmem:[#allocation6 + $0x28] sm:$0xf]
    %v2106 = vld [vmem:[#allocation6 + $0x2c] sm:$0xf]
    %v2107 = vld [vmem:[#allocation6 + $0x30] sm:$0xf]
    %v2108 = vld [vmem:[#allocation6 + $0x34] sm:$0xf]
    %v2109 = vld [vmem:[#allocation6 + $0x38] sm:$0xf]
    %v2110 = vld [vmem:[#allocation6 + $0x3c] sm:$0xf]
    %v2111 = vld [vmem:[#allocation6 + $0x40] sm:$0xf]
    %v2112 = vld [vmem:[#allocation6 + $0x44] sm:$0xf]
    %v2113 = vld [vmem:[#allocation6 + $0x48] sm:$0xf]
    %v2114 = vld [vmem:[#allocation6 + $0x4c] sm:$0xf]
    %v2115 = vld [vmem:[#allocation6 + $0x50] sm:$0xf]
    %v2116 = vld [vmem:[#allocation6 + $0x54] sm:$0xf]
    %v2117 = vld [vmem:[#allocation6 + $0x58] sm:$0xf]
    %v2118 = vld [vmem:[#allocation6 + $0x5c] sm:$0xf]
    %v2119 = vld [vmem:[#allocation6 + $0x60] sm:$0xf]
    %v2120 = vld [vmem:[#allocation6 + $0x64] sm:$0xf]
    %v2121 = vld [vmem:[#allocation6 + $0x68] sm:$0xf]
    %v2122 = vld [vmem:[#allocation6 + $0x6c] sm:$0xf]
    %v2123 = vld [vmem:[#allocation6 + $0x70] sm:$0xf]
    %v2124 = vld [vmem:[#allocation6 + $0x74] sm:$0xf]
    %v2125 = vld [vmem:[#allocation6 + $0x78] sm:$0xf]
    %v2126 = vld [vmem:[#allocation6 + $0x7c] sm:$0xf]
    %v2127 = vpack.c.bf16 %v2091, %v2091
    %v2128 = vpack.c.bf16 %v2092, %v2092
    %s2129 = scalar_lea.vmem [#allocation6], 128
    %v2130 = vld [vmem:[%s2129] sm:$0xf]
    %v2131 = vld [vmem:[%s2129 + $0x4] sm:$0xf]
    %v2132 = vld [vmem:[%s2129 + $0x8] sm:$0xf]
    %v2133 = vld [vmem:[%s2129 + $0xc] sm:$0xf]
    %v2134 = vld [vmem:[%s2129 + $0x10] sm:$0xf]
    %v2135 = vld [vmem:[%s2129 + $0x14] sm:$0xf]
    %v2136 = vld [vmem:[%s2129 + $0x18] sm:$0xf]
    %v2137 = vld [vmem:[%s2129 + $0x1c] sm:$0xf]
    %v2138 = vld [vmem:[%s2129 + $0x20] sm:$0xf]
    %v2139 = vld [vmem:[%s2129 + $0x24] sm:$0xf]
    %v2140 = vld [vmem:[%s2129 + $0x28] sm:$0xf]
    %v2141 = vld [vmem:[%s2129 + $0x2c] sm:$0xf]
    %v2142 = vld [vmem:[%s2129 + $0x30] sm:$0xf]
    %v2143 = vld [vmem:[%s2129 + $0x34] sm:$0xf]
    %v2144 = vld [vmem:[%s2129 + $0x38] sm:$0xf]
    %v2145 = vld [vmem:[%s2129 + $0x3c] sm:$0xf]
    %v2146 = vld [vmem:[%s2129 + $0x40] sm:$0xf]
    %v2147 = vld [vmem:[%s2129 + $0x44] sm:$0xf]
    %v2148 = vld [vmem:[%s2129 + $0x48] sm:$0xf]
    %v2149 = vld [vmem:[%s2129 + $0x4c] sm:$0xf]
    %v2150 = vld [vmem:[%s2129 + $0x50] sm:$0xf]
    %v2151 = vld [vmem:[%s2129 + $0x54] sm:$0xf]
    %v2152 = vld [vmem:[%s2129 + $0x58] sm:$0xf]
    %v2153 = vld [vmem:[%s2129 + $0x5c] sm:$0xf]
    %v2154 = vld [vmem:[%s2129 + $0x60] sm:$0xf]
    %v2155 = vld [vmem:[%s2129 + $0x64] sm:$0xf]
    %v2156 = vld [vmem:[%s2129 + $0x68] sm:$0xf]
    %v2157 = vld [vmem:[%s2129 + $0x6c] sm:$0xf]
    %v2158 = vld [vmem:[%s2129 + $0x70] sm:$0xf]
    %v2159 = vld [vmem:[%s2129 + $0x74] sm:$0xf]
    %v2160 = vld [vmem:[%s2129 + $0x78] sm:$0xf]
    %v2161 = vld [vmem:[%s2129 + $0x7c] sm:$0xf]
    %v2194 = vunpack.c.l.b16 %v2130
    %v2195 = vunpack.c.l.b16 %v2131
    %v2196 = vunpack.c.l.b16 %v2132
    %v2197 = vunpack.c.l.b16 %v2133
    %v2198 = vunpack.c.l.b16 %v2134
    %v2199 = vunpack.c.l.b16 %v2135
    %v2200 = vunpack.c.l.b16 %v2136
    %v2201 = vunpack.c.l.b16 %v2137
    %v2202 = vunpack.c.l.b16 %v2138
    %v2203 = vunpack.c.l.b16 %v2139
    %v2204 = vunpack.c.l.b16 %v2140
    %v2205 = vunpack.c.l.b16 %v2141
    %v2206 = vunpack.c.l.b16 %v2142
    %v2207 = vunpack.c.l.b16 %v2143
    %v2208 = vunpack.c.l.b16 %v2144
    %v2209 = vunpack.c.l.b16 %v2145
    %v2210 = vunpack.c.l.b16 %v2146
    %v2211 = vunpack.c.l.b16 %v2147
    %v2212 = vunpack.c.l.b16 %v2148
    %v2213 = vunpack.c.l.b16 %v2149
    %v2214 = vunpack.c.l.b16 %v2150
    %v2215 = vunpack.c.l.b16 %v2151
    %v2216 = vunpack.c.l.b16 %v2152
    %v2217 = vunpack.c.l.b16 %v2153
    %v2218 = vunpack.c.l.b16 %v2154
    %v2219 = vunpack.c.l.b16 %v2155
    %v2220 = vunpack.c.l.b16 %v2156
    %v2221 = vunpack.c.l.b16 %v2157
    %v2222 = vunpack.c.l.b16 %v2158
    %v2223 = vunpack.c.l.b16 %v2159
    %v2224 = vunpack.c.l.b16 %v2160
    %v2225 = vunpack.c.l.b16 %v2161
    %v2226 = vpack.c.b16 %v2195, %v2194
    %v2227 = vpack.c.b16 %v2197, %v2196
    %v2228 = vpack.c.b16 %v2199, %v2198
    %v2229 = vpack.c.b16 %v2201, %v2200
    %v2230 = vpack.c.b16 %v2203, %v2202
    %v2231 = vpack.c.b16 %v2205, %v2204
    %v2232 = vpack.c.b16 %v2207, %v2206
    %v2233 = vpack.c.b16 %v2209, %v2208
    %v2234 = vpack.c.b16 %v2211, %v2210
    %v2235 = vpack.c.b16 %v2213, %v2212
    %v2236 = vpack.c.b16 %v2215, %v2214
    %v2237 = vpack.c.b16 %v2217, %v2216
    %v2238 = vpack.c.b16 %v2219, %v2218
    %v2239 = vpack.c.b16 %v2221, %v2220
    %v2240 = vpack.c.b16 %v2223, %v2222
    %v2241 = vpack.c.b16 %v2225, %v2224
    %2258 = vmatprep.subr.bf16.mxu0 0
    %2259 = vmatpush1.bf16.msra.mxu0 %v2226
    %2260 = vmatprep.subr.bf16.mxu0 0
    %2261 = vmatpush1.bf16.msra.mxu0 %v2227
    %2262 = vmatprep.subr.bf16.mxu0 0
    %2263 = vmatpush1.bf16.msra.mxu0 %v2228
    %2264 = vmatprep.subr.bf16.mxu0 0
    %2265 = vmatpush1.bf16.msra.mxu0 %v2229
    %2266 = vmatprep.subr.bf16.mxu0 0
    %2267 = vmatpush1.bf16.msra.mxu0 %v2230
    %2268 = vmatprep.subr.bf16.mxu0 0
    %2269 = vmatpush1.bf16.msra.mxu0 %v2231
    %2270 = vmatprep.subr.bf16.mxu0 0
    %2271 = vmatpush1.bf16.msra.mxu0 %v2232
    %2272 = vmatprep.subr.bf16.mxu0 0
    %2273 = vmatpush1.bf16.msra.mxu0 %v2233
    %2274 = vmatprep.subr.bf16.mxu0 0
    %2275 = vmatpush1.bf16.msra.mxu0 %v2234
    %2276 = vmatprep.subr.bf16.mxu0 0
    %2277 = vmatpush1.bf16.msra.mxu0 %v2235
    %2278 = vmatprep.subr.bf16.mxu0 0
    %2279 = vmatpush1.bf16.msra.mxu0 %v2236
    %2280 = vmatprep.subr.bf16.mxu0 0
    %2281 = vmatpush1.bf16.msra.mxu0 %v2237
    %2282 = vmatprep.subr.bf16.mxu0 0
    %2283 = vmatpush1.bf16.msra.mxu0 %v2238
    %2284 = vmatprep.subr.bf16.mxu0 0
    %2285 = vmatpush1.bf16.msra.mxu0 %v2239
    %2286 = vmatprep.subr.bf16.mxu0 0
    %2287 = vmatpush1.bf16.msra.mxu0 %v2240
    %2288 = vmatprep.subr.bf16.mxu0 0
    %2289 = vmatpush1.bf16.msra.mxu0 %v2241
    %2290 = vmatprep.mubr.bf16.mxu0 %v2128
    %2291 = vmatmul.mubr.bf16.gmra.mrb[0].mxu0 %v2127
    %v2292 = vpop.f32.mrb[0].mxu0
    %v2293 = vadd.f32 0.0, %v2292
    %v2294 = vpop.f32.mrb[0].mxu0
    %v2295 = vpop.f32.mrb[0].mxu0
    %v2296 = vpop.f32.mrb[0].mxu0
    %2297 = vdwg.mxu0
    %v2330 = vunpack.c.l.b16 %v2095
    %v2331 = vunpack.c.l.b16 %v2096
    %v2332 = vunpack.c.l.b16 %v2097
    %v2333 = vunpack.c.l.b16 %v2098
    %v2334 = vunpack.c.l.b16 %v2099
    %v2335 = vunpack.c.l.b16 %v2100
    %v2336 = vunpack.c.l.b16 %v2101
    %v2337 = vunpack.c.l.b16 %v2102
    %v2338 = vunpack.c.l.b16 %v2103
    %v2339 = vunpack.c.l.b16 %v2104
    %v2340 = vunpack.c.l.b16 %v2105
    %v2341 = vunpack.c.l.b16 %v2106
    %v2342 = vunpack.c.l.b16 %v2107
    %v2343 = vunpack.c.l.b16 %v2108
    %v2344 = vunpack.c.l.b16 %v2109
    %v2345 = vunpack.c.l.b16 %v2110
    %v2346 = vunpack.c.l.b16 %v2111
    %v2347 = vunpack.c.l.b16 %v2112
    %v2348 = vunpack.c.l.b16 %v2113
    %v2349 = vunpack.c.l.b16 %v2114
    %v2350 = vunpack.c.l.b16 %v2115
    %v2351 = vunpack.c.l.b16 %v2116
    %v2352 = vunpack.c.l.b16 %v2117
    %v2353 = vunpack.c.l.b16 %v2118
    %v2354 = vunpack.c.l.b16 %v2119
    %v2355 = vunpack.c.l.b16 %v2120
    %v2356 = vunpack.c.l.b16 %v2121
    %v2357 = vunpack.c.l.b16 %v2122
    %v2358 = vunpack.c.l.b16 %v2123
    %v2359 = vunpack.c.l.b16 %v2124
    %v2360 = vunpack.c.l.b16 %v2125
    %v2361 = vunpack.c.l.b16 %v2126
    %v2362 = vpack.c.b16 %v2331, %v2330
    %v2363 = vpack.c.b16 %v2333, %v2332
    %v2364 = vpack.c.b16 %v2335, %v2334
    %v2365 = vpack.c.b16 %v2337, %v2336
    %v2366 = vpack.c.b16 %v2339, %v2338
    %v2367 = vpack.c.b16 %v2341, %v2340
    %v2368 = vpack.c.b16 %v2343, %v2342
    %v2369 = vpack.c.b16 %v2345, %v2344
    %v2370 = vpack.c.b16 %v2347, %v2346
    %v2371 = vpack.c.b16 %v2349, %v2348
    %v2372 = vpack.c.b16 %v2351, %v2350
    %v2373 = vpack.c.b16 %v2353, %v2352
    %v2374 = vpack.c.b16 %v2355, %v2354
    %v2375 = vpack.c.b16 %v2357, %v2356
    %v2376 = vpack.c.b16 %v2359, %v2358
    %v2377 = vpack.c.b16 %v2361, %v2360
    %2394 = vmatprep.subr.bf16.mxu0 0
    %2395 = vmatpush1.bf16.msra.mxu0 %v2362
    %2396 = vmatprep.subr.bf16.mxu0 0
    %2397 = vmatpush1.bf16.msra.mxu0 %v2363
    %2398 = vmatprep.subr.bf16.mxu0 0
    %2399 = vmatpush1.bf16.msra.mxu0 %v2364
    %2400 = vmatprep.subr.bf16.mxu0 0
    %2401 = vmatpush1.bf16.msra.mxu0 %v2365
    %2402 = vmatprep.subr.bf16.mxu0 0
    %2403 = vmatpush1.bf16.msra.mxu0 %v2366
    %2404 = vmatprep.subr.bf16.mxu0 0
    %2405 = vmatpush1.bf16.msra.mxu0 %v2367
    %2406 = vmatprep.subr.bf16.mxu0 0
    %2407 = vmatpush1.bf16.msra.mxu0 %v2368
    %2408 = vmatprep.subr.bf16.mxu0 0
    %2409 = vmatpush1.bf16.msra.mxu0 %v2369
    %2410 = vmatprep.subr.bf16.mxu0 0
    %2411 = vmatpush1.bf16.msra.mxu0 %v2370
    %2412 = vmatprep.subr.bf16.mxu0 0
    %2413 = vmatpush1.bf16.msra.mxu0 %v2371
    %2414 = vmatprep.subr.bf16.mxu0 0
    %2415 = vmatpush1.bf16.msra.mxu0 %v2372
    %2416 = vmatprep.subr.bf16.mxu0 0
    %2417 = vmatpush1.bf16.msra.mxu0 %v2373
    %2418 = vmatprep.subr.bf16.mxu0 0
    %2419 = vmatpush1.bf16.msra.mxu0 %v2374
    %2420 = vmatprep.subr.bf16.mxu0 0
    %2421 = vmatpush1.bf16.msra.mxu0 %v2375
    %2422 = vmatprep.subr.bf16.mxu0 0
    %2423 = vmatpush1.bf16.msra.mxu0 %v2376
    %2424 = vmatprep.subr.bf16.mxu0 0
    %2425 = vmatpush1.bf16.msra.mxu0 %v2377
    %2426 = vmatprep.mubr.bf16.mxu0 %v2094
    %2427 = vmatmul.mubr.bf16.gmra.mrb[0].mxu0 %v2093
    %v2428 = vpop.f32.mrb[0].mxu0
    %v2429 = vadd.f32 %v2293, %v2428
    %v2430 = vpop.f32.mrb[0].mxu0
    %v2431 = vpop.f32.mrb[0].mxu0
    %v2432 = vpop.f32.mrb[0].mxu0
    %2433 = vdwg.mxu0
    %v2434 = vld [vmem:[%s4 + $0x10] ss:$0 sm:$0xff]
    %v2435 = vadd.f32 %v2429, %v2434
    %2436 = vst [vmem:[%s5] sm:$0xff] %v2435
    // Predicated region
    $region34: #{actor_critic_forward.1} parent=1 // pred_check
      _
    $region35: #{actor_critic_forward.1} parent=1 // pred_check_branch
      %2438 = sbr.rel (0) target = $region37
    $region36: #{actor_critic_forward.1} parent=1 // pred_region
      _
    $region37: #{actor_critic_forward.1} parent=1 // pred_fallthru
      _
    // Predicated region
    $region38: #{actor_critic_forward.1} parent=1 // pred_check
      _
    $region39: #{actor_critic_forward.1} parent=1 // pred_check_branch
      %2440 = sbr.rel (0) target = $region41
    $region40: #{actor_critic_forward.1} parent=1 // pred_region
      _
    $region41: #{actor_critic_forward.1} parent=1 // pred_fallthru
      _
    %2441 = vsyncpa [#allocation3], 1
    %2442 = vsyncpa [#allocation5], 1

</llo_original>
